<compile_context>
chip_gen: v7x
topology: tpu7x:2x2x1
jax: 0.10.0
libtpu: 0.0.40
codegen_flags: <defaults>
</compile_context>

<pallas_src>
import functools

import jax
import jax.numpy as jnp
from jax.experimental import pallas as pl
from jax.experimental.pallas import tpu as pltpu

NEG_SLOPE = 0.01   # F.leaky_relu default slope
BN_EPS = 1e-5      # nn.BatchNorm1d default eps


def _leaky_relu(x):
    return jnp.where(x > 0, x, NEG_SLOPE * x)


def _bn_scale_shift(psum, psumsq, count, gamma, beta):
    """Fold training-mode BatchNorm1d (biased batch variance) into a per-feature
    affine:  y = x * scale + shift,  computed from accumulated sum / sum(x^2)."""
    mean = psum / count
    var = psumsq / count - mean * mean
    inv = jax.lax.rsqrt(var + BN_EPS)
    scale = gamma * inv
    shift = beta - mean * scale
    return scale, shift


# --------------------------------------------------------------------------- #
# Kernels
# --------------------------------------------------------------------------- #
def _linear_lrelu_stats_kernel(x_ref, scale_ref, shift_ref, w_ref, b_ref,
                               h_ref, sum_ref, sumsq_ref):
    """h = leaky_relu((x*scale + shift) @ W + b); accumulate sum(h), sum(h^2)."""
    @pl.when(pl.program_id(0) == 0)
    def _():
        sum_ref[...] = jnp.zeros_like(sum_ref)
        sumsq_ref[...] = jnp.zeros_like(sumsq_ref)

    x = x_ref[...] * scale_ref[...] + shift_ref[...]          # f32 elementwise
    h = jnp.dot(x.astype(jnp.bfloat16), w_ref[...],           # bf16 MXU matmul
                preferred_element_type=jnp.float32) + b_ref[...]
    h = _leaky_relu(h)
    h_ref[...] = h
    sum_ref[...] += jnp.sum(h, axis=0, keepdims=True)
    sumsq_ref[...] += jnp.sum(h * h, axis=0, keepdims=True)


def _linear_lrelu_kernel(x_ref, scale_ref, shift_ref, w_ref, b_ref, out_ref):
    """out = leaky_relu((x*scale + shift) @ W + b)  (final layer, no BN)."""
    x = x_ref[...] * scale_ref[...] + shift_ref[...]
    h = jnp.dot(x.astype(jnp.bfloat16), w_ref[...],
                preferred_element_type=jnp.float32) + b_ref[...]
    out_ref[...] = _leaky_relu(h)


# --------------------------------------------------------------------------- #
# pallas_call wrappers
# --------------------------------------------------------------------------- #
def _common_in_specs(tile_b, f_in, f_out):
    return [
        pl.BlockSpec((tile_b, f_in), lambda i: (i, 0)),   # x: batch-tiled
        pl.BlockSpec((1, f_in), lambda i: (0, 0)),        # BN scale (resident)
        pl.BlockSpec((1, f_in), lambda i: (0, 0)),        # BN shift (resident)
        pl.BlockSpec((f_in, f_out), lambda i: (0, 0)),    # W (resident, bf16)
        pl.BlockSpec((1, f_out), lambda i: (0, 0)),       # bias (resident)
    ]


def _cost(batch, f_in, f_out):
    flops = 2 * batch * f_in * f_out + 6 * batch * f_out
    bytes_accessed = (4 * batch * (f_in + f_out)        # x read + h write (f32)
                      + 2 * f_in * f_out                # bf16 weights
                      + 4 * (2 * f_in + 4 * f_out))     # scale/shift/bias/stats
    return pl.CostEstimate(flops=flops, transcendentals=0,
                           bytes_accessed=bytes_accessed)


def _layer_with_stats(x, scale, shift, w_bf16, b, *, tile_b):
    batch, f_in = x.shape
    f_out = w_bf16.shape[1]
    return pl.pallas_call(
        _linear_lrelu_stats_kernel,
        grid=(batch // tile_b,),
        in_specs=_common_in_specs(tile_b, f_in, f_out),
        out_specs=(
            pl.BlockSpec((tile_b, f_out), lambda i: (i, 0)),   # h: batch-tiled
            pl.BlockSpec((1, f_out), lambda i: (0, 0)),        # sum accumulator
            pl.BlockSpec((1, f_out), lambda i: (0, 0)),        # sumsq accumulator
        ),
        out_shape=(
            jax.ShapeDtypeStruct((batch, f_out), jnp.float32),
            jax.ShapeDtypeStruct((1, f_out), jnp.float32),
            jax.ShapeDtypeStruct((1, f_out), jnp.float32),
        ),
        # Accumulators span the batch axis -> must be a sequential axis.
        compiler_params=pltpu.CompilerParams(
            dimension_semantics=("arbitrary",)),
        cost_estimate=_cost(batch, f_in, f_out),
    )(x, scale, shift, w_bf16, b)


def _layer_final(x, scale, shift, w_bf16, b, *, tile_b):
    batch, f_in = x.shape
    f_out = w_bf16.shape[1]
    return pl.pallas_call(
        _linear_lrelu_kernel,
        grid=(batch // tile_b,),
        in_specs=_common_in_specs(tile_b, f_in, f_out),
        out_specs=pl.BlockSpec((tile_b, f_out), lambda i: (i, 0)),
        out_shape=jax.ShapeDtypeStruct((batch, f_out), jnp.float32),
        # Batch tiles are independent here -> shard across v7x's 2 TensorCores.
        compiler_params=pltpu.CompilerParams(
            dimension_semantics=("parallel",)),
        cost_estimate=_cost(batch, f_in, f_out),
    )(x, scale, shift, w_bf16, b)


def _pick_tile_b(batch, requested=None, target=2048):
    """Largest batch tile <= target that divides B and keeps sublanes aligned."""
    if requested is not None:
        assert batch % requested == 0, "tile_b must divide the batch size"
        return requested
    for t in range(min(batch, target), 0, -1):
        if batch % t == 0 and (t % 8 == 0 or t == batch):
            return t
    return batch


# --------------------------------------------------------------------------- #
# Forward pass
# --------------------------------------------------------------------------- #
def generator_forward(x, params, tile_b=None):
    """x: (B, 32) float32.  params: dict from init_params."""
    batch = x.shape[0]
    tb = _pick_tile_b(batch, tile_b)
    count = jnp.float32(batch)

    # Identity pre-scale/shift for the first layer (no preceding BatchNorm).
    scale = jnp.ones((1, x.shape[1]), jnp.float32)
    shift = jnp.zeros((1, x.shape[1]), jnp.float32)

    h = x
    for i in range(3):
        w = params[f"w{i}"].astype(jnp.bfloat16)
        h, psum, psumsq = _layer_with_stats(h, scale, shift, w,
                                            params[f"b{i}"], tile_b=tb)
        scale, shift = _bn_scale_shift(psum, psumsq, count,
                                       params[f"g{i}"], params[f"be{i}"])

    w3 = params["w3"].astype(jnp.bfloat16)
    return _layer_final(h, scale, shift, w3, params["b3"], tile_b=tb)


def init_params(key):
    """Deterministic init matching nn.Linear / nn.BatchNorm1d shapes.

    Linear weights stored pre-transposed as (in, out); biases as (1, out);
    BatchNorm gamma=1, beta=0 (PyTorch default init), stored as (1, features).
    """
    dims = [(32, 64), (64, 64), (64, 128), (128, 128)]
    params = {}
    keys = jax.random.split(key, 8)
    for i, (fin, fout) in enumerate(dims):
        bound = 1.0 / jnp.sqrt(fin)
        params[f"w{i}"] = jax.random.uniform(keys[2 * i], (fin, fout),
                                             jnp.float32, -bound, bound)
        params[f"b{i}"] = jax.random.uniform(keys[2 * i + 1], (1, fout),
                                             jnp.float32, -bound, bound)
    for i, feat in enumerate([64, 64, 128]):
        params[f"g{i}"] = jnp.ones((1, feat), jnp.float32)
        params[f"be{i}"] = jnp.zeros((1, feat), jnp.float32)
    return params


def generator_reference(x, params):
    """Pure-JAX reference mirroring the kernel numerics (bf16 MXU operands,
    f32 elementwise, BatchNorm folded into a per-feature scale/shift)."""
    batch = x.shape[0]
    count = jnp.float32(batch)
    scale = jnp.ones((1, x.shape[1]), jnp.float32)
    shift = jnp.zeros((1, x.shape[1]), jnp.float32)
    h = x
    for i in range(4):
        z = (h * scale + shift).astype(jnp.bfloat16)
        h = jnp.dot(z, params[f"w{i}"].astype(jnp.bfloat16),
                    preferred_element_type=jnp.float32) + params[f"b{i}"]
        h = _leaky_relu(h)
        if i < 3:
            psum = jnp.sum(h, axis=0, keepdims=True)
            psumsq = jnp.sum(h * h, axis=0, keepdims=True)
            scale, shift = _bn_scale_shift(psum, psumsq, count,
                                           params[f"g{i}"], params[f"be{i}"])
    return h


if __name__ == "__main__":
    key = jax.random.PRNGKey(0)
    k_x, k_p = jax.random.split(key)

    B = 32                       # small test batch; tile_b=8 -> 4-step grid
    x = jax.random.normal(k_x, (B, 32), dtype=jnp.float32)
    params = init_params(k_p)

    fwd = jax.jit(functools.partial(generator_forward, tile_b=8))
    out = jax.block_until_ready(fwd(x, params))

    ref = generator_reference(x, params)
    assert out.shape == (B, 128), out.shape
    max_err = float(jnp.max(jnp.abs(out - ref)))
    assert jnp.allclose(out, ref, atol=1e-3, rtol=1e-3), (
        f"mismatch vs reference: max abs err {max_err}")

    print("KERNEL_OK")
</pallas_src>

<mosaic_0001>
module attributes {stable_mosaic.version = 11 : i64} {
  func.func @_linear_lrelu_stats_kernel(%arg0: i32, %arg1: memref<8x32xf32, #tpu.memory_space<vmem>>, %arg2: memref<1x32xf32, #tpu.memory_space<vmem>>, %arg3: memref<1x32xf32, #tpu.memory_space<vmem>>, %arg4: memref<32x64xbf16, #tpu.memory_space<vmem>>, %arg5: memref<1x64xf32, #tpu.memory_space<vmem>>, %arg6: memref<8x64xf32, #tpu.memory_space<vmem>>, %arg7: memref<1x64xf32, #tpu.memory_space<vmem>>, %arg8: memref<1x64xf32, #tpu.memory_space<vmem>>) attributes {dimension_semantics = [#tpu.dimension_semantics<arbitrary>], iteration_bounds = array<i64: 4>, scalar_prefetch = 0 : i64, scratch_operands = 0 : i64, tpu.core_type = #tpu.core_type<tc>, window_params = [{transform_indices = @transform_0, window_bounds = array<i64: 8, 32>}, {pipeline_mode = #tpu.pipeline_mode<synchronous>, transform_indices = @transform_1, window_bounds = array<i64: 1, 32>}, {pipeline_mode = #tpu.pipeline_mode<synchronous>, transform_indices = @transform_2, window_bounds = array<i64: 1, 32>}, {pipeline_mode = #tpu.pipeline_mode<synchronous>, transform_indices = @transform_3, window_bounds = array<i64: 32, 64>}, {pipeline_mode = #tpu.pipeline_mode<synchronous>, transform_indices = @transform_4, window_bounds = array<i64: 1, 64>}, {transform_indices = @transform_5, window_bounds = array<i64: 8, 64>}, {pipeline_mode = #tpu.pipeline_mode<synchronous>, transform_indices = @transform_6, window_bounds = array<i64: 1, 64>}, {pipeline_mode = #tpu.pipeline_mode<synchronous>, transform_indices = @transform_7, window_bounds = array<i64: 1, 64>}]} {
    %c0_i32 = arith.constant 0 : i32
    %0 = arith.cmpi eq, %arg0, %c0_i32 : i32
    %1 = arith.extui %0 : i1 to i32
    %c0_i32_0 = arith.constant 0 : i32
    %2 = arith.cmpi ne, %1, %c0_i32_0 : i32
    scf.if %2 {
      %cst_24 = arith.constant 0.000000e+00 : f32
      %33 = vector.broadcast %cst_24 : f32 to vector<1x64xf32>
      %c0_25 = arith.constant 0 : index
      %c0_26 = arith.constant 0 : index
      %34 = vector.load %arg7[%c0_25, %c0_26] : memref<1x64xf32, #tpu.memory_space<vmem>>, vector<1x64xf32>
      tpu.vector_store %arg7[%c0_25, %c0_26], %33 {strides = array<i32>} : memref<1x64xf32, #tpu.memory_space<vmem>>, vector<1x64xf32>,
      %cst_27 = arith.constant 0.000000e+00 : f32
      %35 = vector.broadcast %cst_27 : f32 to vector<1x64xf32>
      %c0_28 = arith.constant 0 : index
      %c0_29 = arith.constant 0 : index
      %36 = vector.load %arg8[%c0_28, %c0_29] : memref<1x64xf32, #tpu.memory_space<vmem>>, vector<1x64xf32>
      tpu.vector_store %arg8[%c0_28, %c0_29], %35 {strides = array<i32>} : memref<1x64xf32, #tpu.memory_space<vmem>>, vector<1x64xf32>,
    } else {
    }
    %c0 = arith.constant 0 : index
    %c0_1 = arith.constant 0 : index
    %3 = vector.load %arg1[%c0, %c0_1] : memref<8x32xf32, #tpu.memory_space<vmem>>, vector<8x32xf32>
    %c0_2 = arith.constant 0 : index
    %c0_3 = arith.constant 0 : index
    %4 = vector.load %arg2[%c0_2, %c0_3] : memref<1x32xf32, #tpu.memory_space<vmem>>, vector<1x32xf32>
    %5 = vector.broadcast %4 : vector<1x32xf32> to vector<8x32xf32>
    %6 = arith.mulf %3, %5 : vector<8x32xf32>
    %c0_4 = arith.constant 0 : index
    %c0_5 = arith.constant 0 : index
    %7 = vector.load %arg3[%c0_4, %c0_5] : memref<1x32xf32, #tpu.memory_space<vmem>>, vector<1x32xf32>
    %8 = vector.broadcast %7 : vector<1x32xf32> to vector<8x32xf32>
    %9 = arith.addf %6, %8 : vector<8x32xf32>
    %10 = arith.truncf %9 : vector<8x32xf32> to vector<8x32xbf16>
    %c0_6 = arith.constant 0 : index
    %c0_7 = arith.constant 0 : index
    %11 = vector.load %arg4[%c0_6, %c0_7] : memref<32x64xbf16, #tpu.memory_space<vmem>>, vector<32x64xbf16>
    %cst = arith.constant dense<0.000000e+00> : vector<8x64xf32>
    %12 = tpu.matmul %10, %11, %cst {dimension_numbers = #tpu.dot_dimension_numbers<[1], [0], [0], [1], [0, 0, 1, 1], [], []>} : vector<8x32xbf16>, vector<32x64xbf16>, vector<8x64xf32> -> vector<8x64xf32>
    %c0_8 = arith.constant 0 : index
    %c0_9 = arith.constant 0 : index
    %13 = vector.load %arg5[%c0_8, %c0_9] : memref<1x64xf32, #tpu.memory_space<vmem>>, vector<1x64xf32>
    %14 = vector.broadcast %13 : vector<1x64xf32> to vector<8x64xf32>
    %15 = arith.addf %12, %14 : vector<8x64xf32>
    %cst_10 = arith.constant 0.000000e+00 : f32
    %16 = vector.broadcast %cst_10 : f32 to vector<8x64xf32>
    %17 = arith.cmpf ogt, %15, %16 : vector<8x64xf32>
    %cst_11 = arith.constant 0.00999999977 : f32
    %18 = vector.broadcast %cst_11 : f32 to vector<8x64xf32>
    %19 = arith.mulf %18, %15 : vector<8x64xf32>
    %20 = arith.select %17, %15, %19 : vector<8x64xi1>, vector<8x64xf32>
    %c0_12 = arith.constant 0 : index
    %c0_13 = arith.constant 0 : index
    %21 = vector.load %arg6[%c0_12, %c0_13] : memref<8x64xf32, #tpu.memory_space<vmem>>, vector<8x64xf32>
    tpu.vector_store %arg6[%c0_12, %c0_13], %20 {strides = array<i32>} : memref<8x64xf32, #tpu.memory_space<vmem>>, vector<8x64xf32>,
    %c0_14 = arith.constant 0 : index
    %c0_15 = arith.constant 0 : index
    %22 = vector.load %arg7[%c0_14, %c0_15] : memref<1x64xf32, #tpu.memory_space<vmem>>, vector<1x64xf32>
    %cst_16 = arith.constant dense<0.000000e+00> : vector<64xf32>
    %23 = vector.multi_reduction <add>, %20, %cst_16 [0] : vector<8x64xf32> to vector<64xf32>
    %24 = vector.shape_cast %23 : vector<64xf32> to vector<1x64xf32>
    %25 = arith.addf %22, %24 : vector<1x64xf32>
    %c0_17 = arith.constant 0 : index
    %c0_18 = arith.constant 0 : index
    %26 = vector.load %arg7[%c0_17, %c0_18] : memref<1x64xf32, #tpu.memory_space<vmem>>, vector<1x64xf32>
    tpu.vector_store %arg7[%c0_17, %c0_18], %25 {strides = array<i32>} : memref<1x64xf32, #tpu.memory_space<vmem>>, vector<1x64xf32>,
    %c0_19 = arith.constant 0 : index
    %c0_20 = arith.constant 0 : index
    %27 = vector.load %arg8[%c0_19, %c0_20] : memref<1x64xf32, #tpu.memory_space<vmem>>, vector<1x64xf32>
    %28 = arith.mulf %20, %20 : vector<8x64xf32>
    %cst_21 = arith.constant dense<0.000000e+00> : vector<64xf32>
    %29 = vector.multi_reduction <add>, %28, %cst_21 [0] : vector<8x64xf32> to vector<64xf32>
    %30 = vector.shape_cast %29 : vector<64xf32> to vector<1x64xf32>
    %31 = arith.addf %27, %30 : vector<1x64xf32>
    %c0_22 = arith.constant 0 : index
    %c0_23 = arith.constant 0 : index
    %32 = vector.load %arg8[%c0_22, %c0_23] : memref<1x64xf32, #tpu.memory_space<vmem>>, vector<1x64xf32>
    tpu.vector_store %arg8[%c0_22, %c0_23], %31 {strides = array<i32>} : memref<1x64xf32, #tpu.memory_space<vmem>>, vector<1x64xf32>,
    return
  }
  func.func @transform_0(%arg0: i32) -> (i32, i32) {
    %c0_i32 = arith.constant 0 : i32
    %c0_i32_0 = arith.constant 0 : i32
    return %arg0, %c0_i32 : i32, i32
  }
  func.func @transform_1(%arg0: i32) -> (i32, i32) {
    %c0_i32 = arith.constant 0 : i32
    %c0_i32_0 = arith.constant 0 : i32
    %c0_i32_1 = arith.constant 0 : i32
    return %c0_i32, %c0_i32_0 : i32, i32
  }
  func.func @transform_2(%arg0: i32) -> (i32, i32) {
    %c0_i32 = arith.constant 0 : i32
    %c0_i32_0 = arith.constant 0 : i32
    %c0_i32_1 = arith.constant 0 : i32
    return %c0_i32, %c0_i32_0 : i32, i32
  }
  func.func @transform_3(%arg0: i32) -> (i32, i32) {
    %c0_i32 = arith.constant 0 : i32
    %c0_i32_0 = arith.constant 0 : i32
    %c0_i32_1 = arith.constant 0 : i32
    return %c0_i32, %c0_i32_0 : i32, i32
  }
  func.func @transform_4(%arg0: i32) -> (i32, i32) {
    %c0_i32 = arith.constant 0 : i32
    %c0_i32_0 = arith.constant 0 : i32
    %c0_i32_1 = arith.constant 0 : i32
    return %c0_i32, %c0_i32_0 : i32, i32
  }
  func.func @transform_5(%arg0: i32) -> (i32, i32) {
    %c0_i32 = arith.constant 0 : i32
    %c0_i32_0 = arith.constant 0 : i32
    return %arg0, %c0_i32 : i32, i32
  }
  func.func @transform_6(%arg0: i32) -> (i32, i32) {
    %c0_i32 = arith.constant 0 : i32
    %c0_i32_0 = arith.constant 0 : i32
    %c0_i32_1 = arith.constant 0 : i32
    return %c0_i32, %c0_i32_0 : i32, i32
  }
  func.func @transform_7(%arg0: i32) -> (i32, i32) {
    %c0_i32 = arith.constant 0 : i32
    %c0_i32_0 = arith.constant 0 : i32
    %c0_i32_1 = arith.constant 0 : i32
    return %c0_i32, %c0_i32_0 : i32, i32
  }
}

module attributes {stable_mosaic.version = 11 : i64} {
  func.func @_linear_lrelu_stats_kernel(%arg0: i32, %arg1: memref<8x64xf32, #tpu.memory_space<vmem>>, %arg2: memref<1x64xf32, #tpu.memory_space<vmem>>, %arg3: memref<1x64xf32, #tpu.memory_space<vmem>>, %arg4: memref<64x64xbf16, #tpu.memory_space<vmem>>, %arg5: memref<1x64xf32, #tpu.memory_space<vmem>>, %arg6: memref<8x64xf32, #tpu.memory_space<vmem>>, %arg7: memref<1x64xf32, #tpu.memory_space<vmem>>, %arg8: memref<1x64xf32, #tpu.memory_space<vmem>>) attributes {dimension_semantics = [#tpu.dimension_semantics<arbitrary>], iteration_bounds = array<i64: 4>, scalar_prefetch = 0 : i64, scratch_operands = 0 : i64, tpu.core_type = #tpu.core_type<tc>, window_params = [{transform_indices = @transform_0, window_bounds = array<i64: 8, 64>}, {pipeline_mode = #tpu.pipeline_mode<synchronous>, transform_indices = @transform_1, window_bounds = array<i64: 1, 64>}, {pipeline_mode = #tpu.pipeline_mode<synchronous>, transform_indices = @transform_2, window_bounds = array<i64: 1, 64>}, {pipeline_mode = #tpu.pipeline_mode<synchronous>, transform_indices = @transform_3, window_bounds = array<i64: 64, 64>}, {pipeline_mode = #tpu.pipeline_mode<synchronous>, transform_indices = @transform_4, window_bounds = array<i64: 1, 64>}, {transform_indices = @transform_5, window_bounds = array<i64: 8, 64>}, {pipeline_mode = #tpu.pipeline_mode<synchronous>, transform_indices = @transform_6, window_bounds = array<i64: 1, 64>}, {pipeline_mode = #tpu.pipeline_mode<synchronous>, transform_indices = @transform_7, window_bounds = array<i64: 1, 64>}]} {
    %c0_i32 = arith.constant 0 : i32
    %0 = arith.cmpi eq, %arg0, %c0_i32 : i32
    %1 = arith.extui %0 : i1 to i32
    %c0_i32_0 = arith.constant 0 : i32
    %2 = arith.cmpi ne, %1, %c0_i32_0 : i32
    scf.if %2 {
      %cst_24 = arith.constant 0.000000e+00 : f32
      %33 = vector.broadcast %cst_24 : f32 to vector<1x64xf32>
      %c0_25 = arith.constant 0 : index
      %c0_26 = arith.constant 0 : index
      %34 = vector.load %arg7[%c0_25, %c0_26] : memref<1x64xf32, #tpu.memory_space<vmem>>, vector<1x64xf32>
      tpu.vector_store %arg7[%c0_25, %c0_26], %33 {strides = array<i32>} : memref<1x64xf32, #tpu.memory_space<vmem>>, vector<1x64xf32>,
      %cst_27 = arith.constant 0.000000e+00 : f32
      %35 = vector.broadcast %cst_27 : f32 to vector<1x64xf32>
      %c0_28 = arith.constant 0 : index
      %c0_29 = arith.constant 0 : index
      %36 = vector.load %arg8[%c0_28, %c0_29] : memref<1x64xf32, #tpu.memory_space<vmem>>, vector<1x64xf32>
      tpu.vector_store %arg8[%c0_28, %c0_29], %35 {strides = array<i32>} : memref<1x64xf32, #tpu.memory_space<vmem>>, vector<1x64xf32>,
    } else {
    }
    %c0 = arith.constant 0 : index
    %c0_1 = arith.constant 0 : index
    %3 = vector.load %arg1[%c0, %c0_1] : memref<8x64xf32, #tpu.memory_space<vmem>>, vector<8x64xf32>
    %c0_2 = arith.constant 0 : index
    %c0_3 = arith.constant 0 : index
    %4 = vector.load %arg2[%c0_2, %c0_3] : memref<1x64xf32, #tpu.memory_space<vmem>>, vector<1x64xf32>
    %5 = vector.broadcast %4 : vector<1x64xf32> to vector<8x64xf32>
    %6 = arith.mulf %3, %5 : vector<8x64xf32>
    %c0_4 = arith.constant 0 : index
    %c0_5 = arith.constant 0 : index
    %7 = vector.load %arg3[%c0_4, %c0_5] : memref<1x64xf32, #tpu.memory_space<vmem>>, vector<1x64xf32>
    %8 = vector.broadcast %7 : vector<1x64xf32> to vector<8x64xf32>
    %9 = arith.addf %6, %8 : vector<8x64xf32>
    %10 = arith.truncf %9 : vector<8x64xf32> to vector<8x64xbf16>
    %c0_6 = arith.constant 0 : index
    %c0_7 = arith.constant 0 : index
    %11 = vector.load %arg4[%c0_6, %c0_7] : memref<64x64xbf16, #tpu.memory_space<vmem>>, vector<64x64xbf16>
    %cst = arith.constant dense<0.000000e+00> : vector<8x64xf32>
    %12 = tpu.matmul %10, %11, %cst {dimension_numbers = #tpu.dot_dimension_numbers<[1], [0], [0], [1], [0, 0, 1, 1], [], []>} : vector<8x64xbf16>, vector<64x64xbf16>, vector<8x64xf32> -> vector<8x64xf32>
    %c0_8 = arith.constant 0 : index
    %c0_9 = arith.constant 0 : index
    %13 = vector.load %arg5[%c0_8, %c0_9] : memref<1x64xf32, #tpu.memory_space<vmem>>, vector<1x64xf32>
    %14 = vector.broadcast %13 : vector<1x64xf32> to vector<8x64xf32>
    %15 = arith.addf %12, %14 : vector<8x64xf32>
    %cst_10 = arith.constant 0.000000e+00 : f32
    %16 = vector.broadcast %cst_10 : f32 to vector<8x64xf32>
    %17 = arith.cmpf ogt, %15, %16 : vector<8x64xf32>
    %cst_11 = arith.constant 0.00999999977 : f32
    %18 = vector.broadcast %cst_11 : f32 to vector<8x64xf32>
    %19 = arith.mulf %18, %15 : vector<8x64xf32>
    %20 = arith.select %17, %15, %19 : vector<8x64xi1>, vector<8x64xf32>
    %c0_12 = arith.constant 0 : index
    %c0_13 = arith.constant 0 : index
    %21 = vector.load %arg6[%c0_12, %c0_13] : memref<8x64xf32, #tpu.memory_space<vmem>>, vector<8x64xf32>
    tpu.vector_store %arg6[%c0_12, %c0_13], %20 {strides = array<i32>} : memref<8x64xf32, #tpu.memory_space<vmem>>, vector<8x64xf32>,
    %c0_14 = arith.constant 0 : index
    %c0_15 = arith.constant 0 : index
    %22 = vector.load %arg7[%c0_14, %c0_15] : memref<1x64xf32, #tpu.memory_space<vmem>>, vector<1x64xf32>
    %cst_16 = arith.constant dense<0.000000e+00> : vector<64xf32>
    %23 = vector.multi_reduction <add>, %20, %cst_16 [0] : vector<8x64xf32> to vector<64xf32>
    %24 = vector.shape_cast %23 : vector<64xf32> to vector<1x64xf32>
    %25 = arith.addf %22, %24 : vector<1x64xf32>
    %c0_17 = arith.constant 0 : index
    %c0_18 = arith.constant 0 : index
    %26 = vector.load %arg7[%c0_17, %c0_18] : memref<1x64xf32, #tpu.memory_space<vmem>>, vector<1x64xf32>
    tpu.vector_store %arg7[%c0_17, %c0_18], %25 {strides = array<i32>} : memref<1x64xf32, #tpu.memory_space<vmem>>, vector<1x64xf32>,
    %c0_19 = arith.constant 0 : index
    %c0_20 = arith.constant 0 : index
    %27 = vector.load %arg8[%c0_19, %c0_20] : memref<1x64xf32, #tpu.memory_space<vmem>>, vector<1x64xf32>
    %28 = arith.mulf %20, %20 : vector<8x64xf32>
    %cst_21 = arith.constant dense<0.000000e+00> : vector<64xf32>
    %29 = vector.multi_reduction <add>, %28, %cst_21 [0] : vector<8x64xf32> to vector<64xf32>
    %30 = vector.shape_cast %29 : vector<64xf32> to vector<1x64xf32>
    %31 = arith.addf %27, %30 : vector<1x64xf32>
    %c0_22 = arith.constant 0 : index
    %c0_23 = arith.constant 0 : index
    %32 = vector.load %arg8[%c0_22, %c0_23] : memref<1x64xf32, #tpu.memory_space<vmem>>, vector<1x64xf32>
    tpu.vector_store %arg8[%c0_22, %c0_23], %31 {strides = array<i32>} : memref<1x64xf32, #tpu.memory_space<vmem>>, vector<1x64xf32>,
    return
  }
  func.func @transform_0(%arg0: i32) -> (i32, i32) {
    %c0_i32 = arith.constant 0 : i32
    %c0_i32_0 = arith.constant 0 : i32
    return %arg0, %c0_i32 : i32, i32
  }
  func.func @transform_1(%arg0: i32) -> (i32, i32) {
    %c0_i32 = arith.constant 0 : i32
    %c0_i32_0 = arith.constant 0 : i32
    %c0_i32_1 = arith.constant 0 : i32
    return %c0_i32, %c0_i32_0 : i32, i32
  }
  func.func @transform_2(%arg0: i32) -> (i32, i32) {
    %c0_i32 = arith.constant 0 : i32
    %c0_i32_0 = arith.constant 0 : i32
    %c0_i32_1 = arith.constant 0 : i32
    return %c0_i32, %c0_i32_0 : i32, i32
  }
  func.func @transform_3(%arg0: i32) -> (i32, i32) {
    %c0_i32 = arith.constant 0 : i32
    %c0_i32_0 = arith.constant 0 : i32
    %c0_i32_1 = arith.constant 0 : i32
    return %c0_i32, %c0_i32_0 : i32, i32
  }
  func.func @transform_4(%arg0: i32) -> (i32, i32) {
    %c0_i32 = arith.constant 0 : i32
    %c0_i32_0 = arith.constant 0 : i32
    %c0_i32_1 = arith.constant 0 : i32
    return %c0_i32, %c0_i32_0 : i32, i32
  }
  func.func @transform_5(%arg0: i32) -> (i32, i32) {
    %c0_i32 = arith.constant 0 : i32
    %c0_i32_0 = arith.constant 0 : i32
    return %arg0, %c0_i32 : i32, i32
  }
  func.func @transform_6(%arg0: i32) -> (i32, i32) {
    %c0_i32 = arith.constant 0 : i32
    %c0_i32_0 = arith.constant 0 : i32
    %c0_i32_1 = arith.constant 0 : i32
    return %c0_i32, %c0_i32_0 : i32, i32
  }
  func.func @transform_7(%arg0: i32) -> (i32, i32) {
    %c0_i32 = arith.constant 0 : i32
    %c0_i32_0 = arith.constant 0 : i32
    %c0_i32_1 = arith.constant 0 : i32
    return %c0_i32, %c0_i32_0 : i32, i32
  }
}

module attributes {stable_mosaic.version = 11 : i64} {
  func.func @_linear_lrelu_stats_kernel(%arg0: i32, %arg1: memref<8x64xf32, #tpu.memory_space<vmem>>, %arg2: memref<1x64xf32, #tpu.memory_space<vmem>>, %arg3: memref<1x64xf32, #tpu.memory_space<vmem>>, %arg4: memref<64x128xbf16, #tpu.memory_space<vmem>>, %arg5: memref<1x128xf32, #tpu.memory_space<vmem>>, %arg6: memref<8x128xf32, #tpu.memory_space<vmem>>, %arg7: memref<1x128xf32, #tpu.memory_space<vmem>>, %arg8: memref<1x128xf32, #tpu.memory_space<vmem>>) attributes {dimension_semantics = [#tpu.dimension_semantics<arbitrary>], iteration_bounds = array<i64: 4>, scalar_prefetch = 0 : i64, scratch_operands = 0 : i64, tpu.core_type = #tpu.core_type<tc>, window_params = [{transform_indices = @transform_0, window_bounds = array<i64: 8, 64>}, {pipeline_mode = #tpu.pipeline_mode<synchronous>, transform_indices = @transform_1, window_bounds = array<i64: 1, 64>}, {pipeline_mode = #tpu.pipeline_mode<synchronous>, transform_indices = @transform_2, window_bounds = array<i64: 1, 64>}, {pipeline_mode = #tpu.pipeline_mode<synchronous>, transform_indices = @transform_3, window_bounds = array<i64: 64, 128>}, {pipeline_mode = #tpu.pipeline_mode<synchronous>, transform_indices = @transform_4, window_bounds = array<i64: 1, 128>}, {transform_indices = @transform_5, window_bounds = array<i64: 8, 128>}, {pipeline_mode = #tpu.pipeline_mode<synchronous>, transform_indices = @transform_6, window_bounds = array<i64: 1, 128>}, {pipeline_mode = #tpu.pipeline_mode<synchronous>, transform_indices = @transform_7, window_bounds = array<i64: 1, 128>}]} {
    %c0_i32 = arith.constant 0 : i32
    %0 = arith.cmpi eq, %arg0, %c0_i32 : i32
    %1 = arith.extui %0 : i1 to i32
    %c0_i32_0 = arith.constant 0 : i32
    %2 = arith.cmpi ne, %1, %c0_i32_0 : i32
    scf.if %2 {
      %cst_24 = arith.constant 0.000000e+00 : f32
      %33 = vector.broadcast %cst_24 : f32 to vector<1x128xf32>
      %c0_25 = arith.constant 0 : index
      %c0_26 = arith.constant 0 : index
      %34 = vector.load %arg7[%c0_25, %c0_26] : memref<1x128xf32, #tpu.memory_space<vmem>>, vector<1x128xf32>
      tpu.vector_store %arg7[%c0_25, %c0_26], %33 {strides = array<i32>} : memref<1x128xf32, #tpu.memory_space<vmem>>, vector<1x128xf32>,
      %cst_27 = arith.constant 0.000000e+00 : f32
      %35 = vector.broadcast %cst_27 : f32 to vector<1x128xf32>
      %c0_28 = arith.constant 0 : index
      %c0_29 = arith.constant 0 : index
      %36 = vector.load %arg8[%c0_28, %c0_29] : memref<1x128xf32, #tpu.memory_space<vmem>>, vector<1x128xf32>
      tpu.vector_store %arg8[%c0_28, %c0_29], %35 {strides = array<i32>} : memref<1x128xf32, #tpu.memory_space<vmem>>, vector<1x128xf32>,
    } else {
    }
    %c0 = arith.constant 0 : index
    %c0_1 = arith.constant 0 : index
    %3 = vector.load %arg1[%c0, %c0_1] : memref<8x64xf32, #tpu.memory_space<vmem>>, vector<8x64xf32>
    %c0_2 = arith.constant 0 : index
    %c0_3 = arith.constant 0 : index
    %4 = vector.load %arg2[%c0_2, %c0_3] : memref<1x64xf32, #tpu.memory_space<vmem>>, vector<1x64xf32>
    %5 = vector.broadcast %4 : vector<1x64xf32> to vector<8x64xf32>
    %6 = arith.mulf %3, %5 : vector<8x64xf32>
    %c0_4 = arith.constant 0 : index
    %c0_5 = arith.constant 0 : index
    %7 = vector.load %arg3[%c0_4, %c0_5] : memref<1x64xf32, #tpu.memory_space<vmem>>, vector<1x64xf32>
    %8 = vector.broadcast %7 : vector<1x64xf32> to vector<8x64xf32>
    %9 = arith.addf %6, %8 : vector<8x64xf32>
    %10 = arith.truncf %9 : vector<8x64xf32> to vector<8x64xbf16>
    %c0_6 = arith.constant 0 : index
    %c0_7 = arith.constant 0 : index
    %11 = vector.load %arg4[%c0_6, %c0_7] : memref<64x128xbf16, #tpu.memory_space<vmem>>, vector<64x128xbf16>
    %cst = arith.constant dense<0.000000e+00> : vector<8x128xf32>
    %12 = tpu.matmul %10, %11, %cst {dimension_numbers = #tpu.dot_dimension_numbers<[1], [0], [0], [1], [0, 0, 1, 1], [], []>} : vector<8x64xbf16>, vector<64x128xbf16>, vector<8x128xf32> -> vector<8x128xf32>
    %c0_8 = arith.constant 0 : index
    %c0_9 = arith.constant 0 : index
    %13 = vector.load %arg5[%c0_8, %c0_9] : memref<1x128xf32, #tpu.memory_space<vmem>>, vector<1x128xf32>
    %14 = vector.broadcast %13 : vector<1x128xf32> to vector<8x128xf32>
    %15 = arith.addf %12, %14 : vector<8x128xf32>
    %cst_10 = arith.constant 0.000000e+00 : f32
    %16 = vector.broadcast %cst_10 : f32 to vector<8x128xf32>
    %17 = arith.cmpf ogt, %15, %16 : vector<8x128xf32>
    %cst_11 = arith.constant 0.00999999977 : f32
    %18 = vector.broadcast %cst_11 : f32 to vector<8x128xf32>
    %19 = arith.mulf %18, %15 : vector<8x128xf32>
    %20 = arith.select %17, %15, %19 : vector<8x128xi1>, vector<8x128xf32>
    %c0_12 = arith.constant 0 : index
    %c0_13 = arith.constant 0 : index
    %21 = vector.load %arg6[%c0_12, %c0_13] : memref<8x128xf32, #tpu.memory_space<vmem>>, vector<8x128xf32>
    tpu.vector_store %arg6[%c0_12, %c0_13], %20 {strides = array<i32>} : memref<8x128xf32, #tpu.memory_space<vmem>>, vector<8x128xf32>,
    %c0_14 = arith.constant 0 : index
    %c0_15 = arith.constant 0 : index
    %22 = vector.load %arg7[%c0_14, %c0_15] : memref<1x128xf32, #tpu.memory_space<vmem>>, vector<1x128xf32>
    %cst_16 = arith.constant dense<0.000000e+00> : vector<128xf32>
    %23 = vector.multi_reduction <add>, %20, %cst_16 [0] : vector<8x128xf32> to vector<128xf32>
    %24 = vector.shape_cast %23 : vector<128xf32> to vector<1x128xf32>
    %25 = arith.addf %22, %24 : vector<1x128xf32>
    %c0_17 = arith.constant 0 : index
    %c0_18 = arith.constant 0 : index
    %26 = vector.load %arg7[%c0_17, %c0_18] : memref<1x128xf32, #tpu.memory_space<vmem>>, vector<1x128xf32>
    tpu.vector_store %arg7[%c0_17, %c0_18], %25 {strides = array<i32>} : memref<1x128xf32, #tpu.memory_space<vmem>>, vector<1x128xf32>,
    %c0_19 = arith.constant 0 : index
    %c0_20 = arith.constant 0 : index
    %27 = vector.load %arg8[%c0_19, %c0_20] : memref<1x128xf32, #tpu.memory_space<vmem>>, vector<1x128xf32>
    %28 = arith.mulf %20, %20 : vector<8x128xf32>
    %cst_21 = arith.constant dense<0.000000e+00> : vector<128xf32>
    %29 = vector.multi_reduction <add>, %28, %cst_21 [0] : vector<8x128xf32> to vector<128xf32>
    %30 = vector.shape_cast %29 : vector<128xf32> to vector<1x128xf32>
    %31 = arith.addf %27, %30 : vector<1x128xf32>
    %c0_22 = arith.constant 0 : index
    %c0_23 = arith.constant 0 : index
    %32 = vector.load %arg8[%c0_22, %c0_23] : memref<1x128xf32, #tpu.memory_space<vmem>>, vector<1x128xf32>
    tpu.vector_store %arg8[%c0_22, %c0_23], %31 {strides = array<i32>} : memref<1x128xf32, #tpu.memory_space<vmem>>, vector<1x128xf32>,
    return
  }
  func.func @transform_0(%arg0: i32) -> (i32, i32) {
    %c0_i32 = arith.constant 0 : i32
    %c0_i32_0 = arith.constant 0 : i32
    return %arg0, %c0_i32 : i32, i32
  }
  func.func @transform_1(%arg0: i32) -> (i32, i32) {
    %c0_i32 = arith.constant 0 : i32
    %c0_i32_0 = arith.constant 0 : i32
    %c0_i32_1 = arith.constant 0 : i32
    return %c0_i32, %c0_i32_0 : i32, i32
  }
  func.func @transform_2(%arg0: i32) -> (i32, i32) {
    %c0_i32 = arith.constant 0 : i32
    %c0_i32_0 = arith.constant 0 : i32
    %c0_i32_1 = arith.constant 0 : i32
    return %c0_i32, %c0_i32_0 : i32, i32
  }
  func.func @transform_3(%arg0: i32) -> (i32, i32) {
    %c0_i32 = arith.constant 0 : i32
    %c0_i32_0 = arith.constant 0 : i32
    %c0_i32_1 = arith.constant 0 : i32
    return %c0_i32, %c0_i32_0 : i32, i32
  }
  func.func @transform_4(%arg0: i32) -> (i32, i32) {
    %c0_i32 = arith.constant 0 : i32
    %c0_i32_0 = arith.constant 0 : i32
    %c0_i32_1 = arith.constant 0 : i32
    return %c0_i32, %c0_i32_0 : i32, i32
  }
  func.func @transform_5(%arg0: i32) -> (i32, i32) {
    %c0_i32 = arith.constant 0 : i32
    %c0_i32_0 = arith.constant 0 : i32
    return %arg0, %c0_i32 : i32, i32
  }
  func.func @transform_6(%arg0: i32) -> (i32, i32) {
    %c0_i32 = arith.constant 0 : i32
    %c0_i32_0 = arith.constant 0 : i32
    %c0_i32_1 = arith.constant 0 : i32
    return %c0_i32, %c0_i32_0 : i32, i32
  }
  func.func @transform_7(%arg0: i32) -> (i32, i32) {
    %c0_i32 = arith.constant 0 : i32
    %c0_i32_0 = arith.constant 0 : i32
    %c0_i32_1 = arith.constant 0 : i32
    return %c0_i32, %c0_i32_0 : i32, i32
  }
}

module attributes {stable_mosaic.version = 11 : i64} {
  func.func @_linear_lrelu_kernel(%arg0: i32, %arg1: memref<8x128xf32, #tpu.memory_space<vmem>>, %arg2: memref<1x128xf32, #tpu.memory_space<vmem>>, %arg3: memref<1x128xf32, #tpu.memory_space<vmem>>, %arg4: memref<128x128xbf16, #tpu.memory_space<vmem>>, %arg5: memref<1x128xf32, #tpu.memory_space<vmem>>, %arg6: memref<8x128xf32, #tpu.memory_space<vmem>>) attributes {dimension_semantics = [#tpu.dimension_semantics<parallel>], iteration_bounds = array<i64: 4>, scalar_prefetch = 0 : i64, scratch_operands = 0 : i64, tpu.core_type = #tpu.core_type<tc>, window_params = [{transform_indices = @transform_0, window_bounds = array<i64: 8, 128>}, {pipeline_mode = #tpu.pipeline_mode<synchronous>, transform_indices = @transform_1, window_bounds = array<i64: 1, 128>}, {pipeline_mode = #tpu.pipeline_mode<synchronous>, transform_indices = @transform_2, window_bounds = array<i64: 1, 128>}, {pipeline_mode = #tpu.pipeline_mode<synchronous>, transform_indices = @transform_3, window_bounds = array<i64: 128, 128>}, {pipeline_mode = #tpu.pipeline_mode<synchronous>, transform_indices = @transform_4, window_bounds = array<i64: 1, 128>}, {transform_indices = @transform_5, window_bounds = array<i64: 8, 128>}]} {
    %c0 = arith.constant 0 : index
    %c0_0 = arith.constant 0 : index
    %0 = vector.load %arg1[%c0, %c0_0] : memref<8x128xf32, #tpu.memory_space<vmem>>, vector<8x128xf32>
    %c0_1 = arith.constant 0 : index
    %c0_2 = arith.constant 0 : index
    %1 = vector.load %arg2[%c0_1, %c0_2] : memref<1x128xf32, #tpu.memory_space<vmem>>, vector<1x128xf32>
    %2 = vector.broadcast %1 : vector<1x128xf32> to vector<8x128xf32>
    %3 = arith.mulf %0, %2 : vector<8x128xf32>
    %c0_3 = arith.constant 0 : index
    %c0_4 = arith.constant 0 : index
    %4 = vector.load %arg3[%c0_3, %c0_4] : memref<1x128xf32, #tpu.memory_space<vmem>>, vector<1x128xf32>
    %5 = vector.broadcast %4 : vector<1x128xf32> to vector<8x128xf32>
    %6 = arith.addf %3, %5 : vector<8x128xf32>
    %7 = arith.truncf %6 : vector<8x128xf32> to vector<8x128xbf16>
    %c0_5 = arith.constant 0 : index
    %c0_6 = arith.constant 0 : index
    %8 = vector.load %arg4[%c0_5, %c0_6] : memref<128x128xbf16, #tpu.memory_space<vmem>>, vector<128x128xbf16>
    %cst = arith.constant dense<0.000000e+00> : vector<8x128xf32>
    %9 = tpu.matmul %7, %8, %cst {dimension_numbers = #tpu.dot_dimension_numbers<[1], [0], [0], [1], [0, 0, 1, 1], [], []>} : vector<8x128xbf16>, vector<128x128xbf16>, vector<8x128xf32> -> vector<8x128xf32>
    %c0_7 = arith.constant 0 : index
    %c0_8 = arith.constant 0 : index
    %10 = vector.load %arg5[%c0_7, %c0_8] : memref<1x128xf32, #tpu.memory_space<vmem>>, vector<1x128xf32>
    %11 = vector.broadcast %10 : vector<1x128xf32> to vector<8x128xf32>
    %12 = arith.addf %9, %11 : vector<8x128xf32>
    %cst_9 = arith.constant 0.000000e+00 : f32
    %13 = vector.broadcast %cst_9 : f32 to vector<8x128xf32>
    %14 = arith.cmpf ogt, %12, %13 : vector<8x128xf32>
    %cst_10 = arith.constant 0.00999999977 : f32
    %15 = vector.broadcast %cst_10 : f32 to vector<8x128xf32>
    %16 = arith.mulf %15, %12 : vector<8x128xf32>
    %17 = arith.select %14, %12, %16 : vector<8x128xi1>, vector<8x128xf32>
    %c0_11 = arith.constant 0 : index
    %c0_12 = arith.constant 0 : index
    %18 = vector.load %arg6[%c0_11, %c0_12] : memref<8x128xf32, #tpu.memory_space<vmem>>, vector<8x128xf32>
    tpu.vector_store %arg6[%c0_11, %c0_12], %17 {strides = array<i32>} : memref<8x128xf32, #tpu.memory_space<vmem>>, vector<8x128xf32>,
    return
  }
  func.func @transform_0(%arg0: i32) -> (i32, i32) {
    %c0_i32 = arith.constant 0 : i32
    %c0_i32_0 = arith.constant 0 : i32
    return %arg0, %c0_i32 : i32, i32
  }
  func.func @transform_1(%arg0: i32) -> (i32, i32) {
    %c0_i32 = arith.constant 0 : i32
    %c0_i32_0 = arith.constant 0 : i32
    %c0_i32_1 = arith.constant 0 : i32
    return %c0_i32, %c0_i32_0 : i32, i32
  }
  func.func @transform_2(%arg0: i32) -> (i32, i32) {
    %c0_i32 = arith.constant 0 : i32
    %c0_i32_0 = arith.constant 0 : i32
    %c0_i32_1 = arith.constant 0 : i32
    return %c0_i32, %c0_i32_0 : i32, i32
  }
  func.func @transform_3(%arg0: i32) -> (i32, i32) {
    %c0_i32 = arith.constant 0 : i32
    %c0_i32_0 = arith.constant 0 : i32
    %c0_i32_1 = arith.constant 0 : i32
    return %c0_i32, %c0_i32_0 : i32, i32
  }
  func.func @transform_4(%arg0: i32) -> (i32, i32) {
    %c0_i32 = arith.constant 0 : i32
    %c0_i32_0 = arith.constant 0 : i32
    %c0_i32_1 = arith.constant 0 : i32
    return %c0_i32, %c0_i32_0 : i32, i32
  }
  func.func @transform_5(%arg0: i32) -> (i32, i32) {
    %c0_i32 = arith.constant 0 : i32
    %c0_i32_0 = arith.constant 0 : i32
    return %arg0, %c0_i32 : i32, i32
  }
}

</mosaic_0001>

<llo_original>
// kernel: generator_forward.4
$region0: #{generator_forward.4}
  #allocation0 [shape = 'u32[]', space=smem, size = 0x4, offset = 0x4, fixed_abs, tag = 'smem constant byte address 0x4 - core index']
  #allocation1 [shape = 'u32[144,128]{1,0:T(1,128)}', space=vmem, size = 0x12000, scoped, tag = 'internal scratch']
  %s0 = inlined_call_operand.hbm [shape: f32[32,32], index: 0, kind: input, shape index: {}]
  %s1 = inlined_call_operand.vmem [shape: f32[1,32], index: 1, kind: input, shape index: {}]
  %s2 = inlined_call_operand.vmem [shape: f32[1,32], index: 2, kind: input, shape index: {}]
  %s3 = inlined_call_operand.vmem [shape: bf16[32,64], index: 3, kind: input, shape index: {}]
  %s4 = inlined_call_operand.vmem [shape: f32[1,64], index: 4, kind: input, shape index: {}]
  %s5 = inlined_call_operand.vmem [shape: f32[32,64], index: 5, kind: output, shape index: {0}]
  %s6 = inlined_call_operand.vmem [shape: f32[1,64], index: 6, kind: output, shape index: {1}]
  %s7 = inlined_call_operand.vmem [shape: f32[1,64], index: 7, kind: output, shape index: {2}]
  %8 = xla_tuple %s5, %s6, %s7
  %s9 = sld [smem:[#allocation0]]
  $region77: #{generator_forward.4} parent=0
    _
  %s11 = ssub.s32 1, %s9
  %s12 = scalar_select 0, %s11, %s9
  $region1: #{generator_forward.4} parent=0
    #allocation2 [shape = 'u8[8192]{0}', space=vmem, size = 0x2000, scoped, tag = 'input window, operand 0']
    #allocation3 [shape = 's32[2]{0}', space=sflag, size = 0x8, scoped, tag = 'scoped memory for generator_forward.4']
    %13 = vsyncpa [#allocation3], 0
    %s14 = scalar_lea.sflag [#allocation3], 1
    %15 = vsyncpa %s14, 0
    loop: start=0, step=1, limit=6
    $region2: #{generator_forward.4} parent=1 // loop_pre_header
      _
    $region3: #{generator_forward.4} parent=1 // loop_header
      %s17 = sphi 0, %s21
      %p18 = scmp.ge.s32.totalorder %s17, 6
      %s27 = sphi 0, %s29
      %s30 = sphi 0, %s27
      %s31 = sphi 0, %s30
      %s47 = sphi 0, %s31
      %s51 = sphi 0, %s51
      %s53 = sphi 0, %s51
      %s54 = sphi 0, %s53
      %s68 = sphi 0, %s54
      %s72 = sphi 0, %s72
      %s74 = sphi 0, %s72
      %s75 = sphi 0, %s74
      %s89 = sphi 0, %s75
      %s93 = sphi 0, %s93
      %s95 = sphi 0, %s93
      %s96 = sphi 0, %s95
      %s110 = sphi 0, %s96
      %s114 = sphi 0, %s114
      %s116 = sphi 0, %s114
      %s117 = sphi 0, %s116
      %s131 = sphi 0, %s117
      %s137 = sphi 0, %s139
      %s140 = sphi 0, %s137
      %s141 = sphi 0, %s140
      %s157 = sphi 0, %s141
      %s161 = sphi 0, %s161
      %s163 = sphi 0, %s161
      %s164 = sphi 0, %s163
      %s178 = sphi 0, %s164
      %s182 = sphi 0, %s182
      %s184 = sphi 0, %s182
      %s185 = sphi 0, %s184
      %s199 = sphi 0, %s185
    $region4: #{generator_forward.4} parent=1 // loop_header_branch
      %20 = sbr.rel (%p18) target = $region8
    $region5: #{generator_forward.4} parent=1 // loop_body
      %s22 = ssub.s32 %s17, 1
      %s23 = ssub.s32 %s17, 2
      %s24 = sadd.s32 %s17, 1
      %s25 = ssub.s32 %s17, %s24
      %p26 = scmp.eq.s32.totalorder %s25, 0
      %s28 = sadd.s32 %s27, 1
      %s29 = scalar_select %p26, %s27, %s28
      %p32 = pneg %p26
      %p33 = scmp.eq.s32.totalorder %s17, 3
      %p34 = por %p32, %p33
      %p35 = scmp.ne.s32.totalorder %s27, %s30
      %p36 = scmp.eq.s32.totalorder %s17, 0
      %p37 = por %p35, %p36
      %p38 = scmp.ne.s32.totalorder %s27, %s30
      %p39 = scmp.eq.s32.totalorder %s22, 3
      %p40 = por %p38, %p39
      %p41 = scmp.ne.s32.totalorder %s30, %s31
      %p42 = scmp.eq.s32.totalorder %s22, 0
      %p43 = por %p41, %p42
      %p44 = scmp.ne.s32.totalorder %s30, %s31
      %p45 = scmp.eq.s32.totalorder %s23, 3
      %p46 = por %p44, %p45
      %p48 = scmp.ne.s32.totalorder %s31, %s47
      %p49 = scmp.eq.s32.totalorder %s23, 0
      %p50 = por %p48, %p49
      %s52 = sadd.s32 %s51, 1
      %p55 = scmp.eq.s32.totalorder %s17, 3
      %p56 = scmp.ne.s32.totalorder %s51, %s53
      %p57 = scmp.eq.s32.totalorder %s17, 0
      %p58 = por %p56, %p57
      %p59 = scmp.ne.s32.totalorder %s51, %s53
      %p60 = scmp.eq.s32.totalorder %s22, 3
      %p61 = por %p59, %p60
      %p62 = scmp.ne.s32.totalorder %s53, %s54
      %p63 = scmp.eq.s32.totalorder %s22, 0
      %p64 = por %p62, %p63
      %p65 = scmp.ne.s32.totalorder %s53, %s54
      %p66 = scmp.eq.s32.totalorder %s23, 3
      %p67 = por %p65, %p66
      %p69 = scmp.ne.s32.totalorder %s54, %s68
      %p70 = scmp.eq.s32.totalorder %s23, 0
      %p71 = por %p69, %p70
      %s73 = sadd.s32 %s72, 1
      %p76 = scmp.eq.s32.totalorder %s17, 3
      %p77 = scmp.ne.s32.totalorder %s72, %s74
      %p78 = scmp.eq.s32.totalorder %s17, 0
      %p79 = por %p77, %p78
      %p80 = scmp.ne.s32.totalorder %s72, %s74
      %p81 = scmp.eq.s32.totalorder %s22, 3
      %p82 = por %p80, %p81
      %p83 = scmp.ne.s32.totalorder %s74, %s75
      %p84 = scmp.eq.s32.totalorder %s22, 0
      %p85 = por %p83, %p84
      %p86 = scmp.ne.s32.totalorder %s74, %s75
      %p87 = scmp.eq.s32.totalorder %s23, 3
      %p88 = por %p86, %p87
      %p90 = scmp.ne.s32.totalorder %s75, %s89
      %p91 = scmp.eq.s32.totalorder %s23, 0
      %p92 = por %p90, %p91
      %s94 = sadd.s32 %s93, 1
      %p97 = scmp.eq.s32.totalorder %s17, 3
      %p98 = scmp.ne.s32.totalorder %s93, %s95
      %p99 = scmp.eq.s32.totalorder %s17, 0
      %p100 = por %p98, %p99
      %p101 = scmp.ne.s32.totalorder %s93, %s95
      %p102 = scmp.eq.s32.totalorder %s22, 3
      %p103 = por %p101, %p102
      %p104 = scmp.ne.s32.totalorder %s95, %s96
      %p105 = scmp.eq.s32.totalorder %s22, 0
      %p106 = por %p104, %p105
      %p107 = scmp.ne.s32.totalorder %s95, %s96
      %p108 = scmp.eq.s32.totalorder %s23, 3
      %p109 = por %p107, %p108
      %p111 = scmp.ne.s32.totalorder %s96, %s110
      %p112 = scmp.eq.s32.totalorder %s23, 0
      %p113 = por %p111, %p112
      %s115 = sadd.s32 %s114, 1
      %p118 = scmp.eq.s32.totalorder %s17, 3
      %p119 = scmp.ne.s32.totalorder %s114, %s116
      %p120 = scmp.eq.s32.totalorder %s17, 0
      %p121 = por %p119, %p120
      %p122 = scmp.ne.s32.totalorder %s114, %s116
      %p123 = scmp.eq.s32.totalorder %s22, 3
      %p124 = por %p122, %p123
      %p125 = scmp.ne.s32.totalorder %s116, %s117
      %p126 = scmp.eq.s32.totalorder %s22, 0
      %p127 = por %p125, %p126
      %p128 = scmp.ne.s32.totalorder %s116, %s117
      %p129 = scmp.eq.s32.totalorder %s23, 3
      %p130 = por %p128, %p129
      %p132 = scmp.ne.s32.totalorder %s117, %s131
      %p133 = scmp.eq.s32.totalorder %s23, 0
      %p134 = por %p132, %p133
      %s135 = ssub.s32 %s17, %s24
      %p136 = scmp.eq.s32.totalorder %s135, 0
      %s138 = sadd.s32 %s137, 1
      %s139 = scalar_select %p136, %s137, %s138
      %p142 = pneg %p136
      %p143 = scmp.eq.s32.totalorder %s17, 3
      %p144 = por %p142, %p143
      %p145 = scmp.ne.s32.totalorder %s137, %s140
      %p146 = scmp.eq.s32.totalorder %s17, 0
      %p147 = por %p145, %p146
      %p148 = scmp.ne.s32.totalorder %s137, %s140
      %p149 = scmp.eq.s32.totalorder %s22, 3
      %p150 = por %p148, %p149
      %p151 = scmp.ne.s32.totalorder %s140, %s141
      %p152 = scmp.eq.s32.totalorder %s22, 0
      %p153 = por %p151, %p152
      %p154 = scmp.ne.s32.totalorder %s140, %s141
      %p155 = scmp.eq.s32.totalorder %s23, 3
      %p156 = por %p154, %p155
      %p158 = scmp.ne.s32.totalorder %s141, %s157
      %p159 = scmp.eq.s32.totalorder %s23, 0
      %p160 = por %p158, %p159
      %s162 = sadd.s32 %s161, 1
      %p165 = scmp.eq.s32.totalorder %s17, 3
      %p166 = scmp.ne.s32.totalorder %s161, %s163
      %p167 = scmp.eq.s32.totalorder %s17, 0
      %p168 = por %p166, %p167
      %p169 = scmp.ne.s32.totalorder %s161, %s163
      %p170 = scmp.eq.s32.totalorder %s22, 3
      %p171 = por %p169, %p170
      %p172 = scmp.ne.s32.totalorder %s163, %s164
      %p173 = scmp.eq.s32.totalorder %s22, 0
      %p174 = por %p172, %p173
      %p175 = scmp.ne.s32.totalorder %s163, %s164
      %p176 = scmp.eq.s32.totalorder %s23, 3
      %p177 = por %p175, %p176
      %p179 = scmp.ne.s32.totalorder %s164, %s178
      %p180 = scmp.eq.s32.totalorder %s23, 0
      %p181 = por %p179, %p180
      %s183 = sadd.s32 %s182, 1
      %p186 = scmp.eq.s32.totalorder %s17, 3
      %p187 = scmp.ne.s32.totalorder %s182, %s184
      %p188 = scmp.eq.s32.totalorder %s17, 0
      %p189 = por %p187, %p188
      %p190 = scmp.ne.s32.totalorder %s182, %s184
      %p191 = scmp.eq.s32.totalorder %s22, 3
      %p192 = por %p190, %p191
      %p193 = scmp.ne.s32.totalorder %s184, %s185
      %p194 = scmp.eq.s32.totalorder %s22, 0
      %p195 = por %p193, %p194
      %p196 = scmp.ne.s32.totalorder %s184, %s185
      %p197 = scmp.eq.s32.totalorder %s23, 3
      %p198 = por %p196, %p197
      %p200 = scmp.ne.s32.totalorder %s185, %s199
      %p201 = scmp.eq.s32.totalorder %s23, 0
      %p202 = por %p200, %p201
      %p203 = scmp.le.s32.totalorder 1, %s17
      %p204 = scmp.lt.s32.totalorder %s17, 5
      %p205 = pnand %p203, %p204
      %p206 = pneg %p205
      // Predicated region
      $region9: #{generator_forward.4} parent=5 // pred_check
        _
      $region10: #{generator_forward.4} parent=5 // pred_check_branch
        %208 = sbr.rel (%p205) target = $region12
      $region11: #{generator_forward.4} parent=5 // pred_region
        %s209 = ssub.s32 %s17, 1
        // Predicated region
        $region13: #{generator_forward.4} parent=11 // pred_check
          %p210 = pneg %p64
        $region14: #{generator_forward.4} parent=11 // pred_check_branch
          %212 = sbr.rel (%p210) target = $region16
        $region15: #{generator_forward.4} parent=11 // pred_region
          _
        $region16: #{generator_forward.4} parent=11 // pred_fallthru
          _
        // Predicated region
        $region17: #{generator_forward.4} parent=11 // pred_check
          %p213 = pneg %p85
        $region18: #{generator_forward.4} parent=11 // pred_check_branch
          %215 = sbr.rel (%p213) target = $region20
        $region19: #{generator_forward.4} parent=11 // pred_region
          _
        $region20: #{generator_forward.4} parent=11 // pred_fallthru
          _
        // Predicated region
        $region21: #{generator_forward.4} parent=11 // pred_check
          %p216 = pneg %p106
        $region22: #{generator_forward.4} parent=11 // pred_check_branch
          %218 = sbr.rel (%p216) target = $region24
        $region23: #{generator_forward.4} parent=11 // pred_region
          _
        $region24: #{generator_forward.4} parent=11 // pred_fallthru
          _
        // Predicated region
        $region25: #{generator_forward.4} parent=11 // pred_check
          %p219 = pneg %p127
        $region26: #{generator_forward.4} parent=11 // pred_check_branch
          %221 = sbr.rel (%p219) target = $region28
        $region27: #{generator_forward.4} parent=11 // pred_region
          _
        $region28: #{generator_forward.4} parent=11 // pred_fallthru
          _
      $region12: #{generator_forward.4} parent=5 // pred_fallthru
        _
      %p222 = scmp.lt.s32.totalorder %s17, 4
      // Predicated region
      $region29: #{generator_forward.4} parent=5 // pred_check
        %p223 = pneg %p222
      $region30: #{generator_forward.4} parent=5 // pred_check_branch
        %225 = sbr.rel (%p223) target = $region32
      $region31: #{generator_forward.4} parent=5 // pred_region
        // Predicated region
        $region33: #{generator_forward.4} parent=31 // pred_check
          %p226 = pneg %p37
        $region34: #{generator_forward.4} parent=31 // pred_check_branch
          %228 = sbr.rel (%p226) target = $region36
        $region35: #{generator_forward.4} parent=31 // pred_region
          %s229 = sand.u32 %s27, 1
          %s230 = scalar_lea.sflag [#allocation3], %s229
          %s231 = sand.u32 %s27, 1
          %s232 = smul.addr %s231, 8
          %s233 = scalar_lea.vmem [#allocation2], %s232
          %s235 = ssub.s32 128, 128
          %236 = vsyncadd %s230, %s235
          %s237 = smul.addr %s17, 128
          %s238 = scalar_lea.hbm %s0, %s237
          %s240 = sshll.u32 %s233, 4
          %s241 = int_to_ptr.vmem [resolvable:$true] %s240
          %243 = dma.hbm_to_vmem [thread:$0]  %s238, 128, %s241, %s230
        $region36: #{generator_forward.4} parent=31 // pred_fallthru
          _
      $region32: #{generator_forward.4} parent=5 // pred_fallthru
        _
      %p244 = scmp.le.s32.totalorder 1, %s17
      %p245 = scmp.lt.s32.totalorder %s17, 5
      %p246 = pnand %p244, %p245
      %p247 = pneg %p246
      // Predicated region
      $region37: #{generator_forward.4} parent=5 // pred_check
        _
      $region38: #{generator_forward.4} parent=5 // pred_check_branch
        %249 = sbr.rel (%p246) target = $region40
      $region39: #{generator_forward.4} parent=5 // pred_region
        %s250 = ssub.s32 %s17, 1
        %s251 = sand.u32 %s30, 1
        %s252 = scalar_lea.sflag [#allocation3], %s251
        %s253 = sand.u32 %s30, 1
        %s254 = smul.addr %s253, 8
        %s255 = scalar_lea.vmem [#allocation2], %s254
        // Predicated region
        $region41: #{generator_forward.4} parent=39 // pred_check
          %p256 = pneg %p43
        $region42: #{generator_forward.4} parent=39 // pred_check_branch
          %258 = sbr.rel (%p256) target = $region44
        $region43: #{generator_forward.4} parent=39 // pred_region
          %259 = dma.done %s252, 128
        $region44: #{generator_forward.4} parent=39 // pred_fallthru
          _
        %s260 = sand.u32 %s30, 1
        %s261 = scalar_lea.sflag [#allocation3], %s260
        %s262 = sand.u32 %s30, 1
        %s263 = smul.addr %s262, 8
        %s264 = scalar_lea.vmem [#allocation2], %s263
        %p265 = pneg %p43
        %p266 = pneg %p40
        %p267 = pneg %p64
        %p268 = pneg %p61
        %p269 = pneg %p85
        %p270 = pneg %p82
        %p271 = pneg %p106
        %p272 = pneg %p103
        %p273 = pneg %p127
        %p274 = pneg %p124
        %p275 = pneg %p153
        %p276 = pneg %p150
        %p277 = scmp.lt.s32.totalorder %s22, 3
        %s278 = scalar_select %p277, %s22, 3
        %s279 = smul.addr %s278, 8
        %s280 = scalar_lea.vmem %s5, %s279
        %p281 = pneg %p174
        %p282 = pneg %p171
        %p283 = pneg %p195
        %p284 = pneg %p192
        %p285 = scmp.lt.s32.totalorder %s22, 3
        %s286 = scalar_select %p285, %s22, 3
        %s287 = smul.addr %s286, 8
        %s288 = scalar_lea.vmem %s5, %s287
        %p290 = scmp.eq.s32.totalorder %s22, 0
        // Predicated region
        $region45: #{generator_forward.4} parent=39 // pred_check
          %p291 = pneg %p290
        $region46: #{generator_forward.4} parent=39 // pred_check_branch
          %293 = sbr.rel (%p291) target = $region48
        $region47: #{generator_forward.4} parent=39 // pred_region
          %vm294 = vcmask 516096
          %295 = vst.msk [vmem:[%s6] sm:$0x1] %vm294, 0.0
          %296 = vst.msk [vmem:[%s7] sm:$0x1] %vm294, 0.0
        $region48: #{generator_forward.4} parent=39 // pred_fallthru
          _
        %v297 = vld [vmem:[%s255] sm:$0xff]
        %v298 = vld [vmem:[%s1] sm:$0x1]
        %v300 = vlaneseq
        %v301 = vshrl.u32 %v300, 7
        %v302 = vsub.s32 0, %v301
        %v303 = vrot.slane %v298, %v302
        %v305 = vmul.f32 %v297, %v303
        %v306 = vld [vmem:[%s2] sm:$0x1]
        %v308 = vlaneseq
        %v309 = vshrl.u32 %v308, 7
        %v310 = vsub.s32 0, %v309
        %v311 = vrot.slane %v306, %v310
        %v313 = vadd.f32 %v305, %v311
        %v314 = vpack.c.bf16 %v313, %v313
        %v315 = vld [vmem:[%s3] sm:$0xf]
        %v316 = vld [vmem:[%s3 + $0x4] sm:$0xf]
        %v317 = vld [vmem:[%s3 + $0x8] sm:$0xf]
        %v318 = vld [vmem:[%s3 + $0xc] sm:$0xf]
        %v319 = vld [vmem:[%s4] sm:$0x1]
        %v321 = vlaneseq
        %v322 = vshrl.u32 %v321, 7
        %v323 = vsub.s32 0, %v322
        %v324 = vrot.slane %v319, %v323
        %v330 = vunpack.c.l.b16 %v315
        %v331 = vunpack.c.l.b16 %v316
        %v332 = vunpack.c.l.b16 %v317
        %v333 = vunpack.c.l.b16 %v318
        %v334 = vpack.c.b16 %v331, %v330
        %v335 = vpack.c.b16 %v333, %v332
        %vm338 = vcmask 261120
        %v340 = vsel %vm338, %v314, 0
        %342 = vmatprep.subr.bf16.mxu0 0
        %343 = vmatpush1.bf16.msra.mxu0 %v334
        %344 = vmatprep.subr.bf16.mxu0 0
        %345 = vmatpush1.bf16.msra.mxu0 %v335
        %346 = vmatprep.subr.bf16.mxu0 0
        %347 = vmatpush1.bf16.msra.mxu0 0
        %348 = vmatprep.subr.bf16.mxu0 0
        %349 = vmatpush1.bf16.msra.mxu0 0
        %350 = vmatprep.subr.bf16.mxu0 0
        %351 = vmatpush1.bf16.msra.mxu0 0
        %352 = vmatprep.subr.bf16.mxu0 0
        %353 = vmatpush1.bf16.msra.mxu0 0
        %354 = vmatprep.subr.bf16.mxu0 0
        %355 = vmatpush1.bf16.msra.mxu0 0
        %356 = vmatprep.subr.bf16.mxu0 0
        %357 = vmatpush1.bf16.msra.mxu0 0
        %358 = vmatprep.subr.bf16.mxu0 0
        %359 = vmatpush1.bf16.msra.mxu0 0
        %360 = vmatprep.subr.bf16.mxu0 0
        %361 = vmatpush1.bf16.msra.mxu0 0
        %362 = vmatprep.subr.bf16.mxu0 0
        %363 = vmatpush1.bf16.msra.mxu0 0
        %364 = vmatprep.subr.bf16.mxu0 0
        %365 = vmatpush1.bf16.msra.mxu0 0
        %366 = vmatprep.subr.bf16.mxu0 0
        %367 = vmatpush1.bf16.msra.mxu0 0
        %368 = vmatprep.subr.bf16.mxu0 0
        %369 = vmatpush1.bf16.msra.mxu0 0
        %370 = vmatprep.subr.bf16.mxu0 0
        %371 = vmatpush1.bf16.msra.mxu0 0
        %372 = vmatprep.subr.bf16.mxu0 0
        %373 = vmatpush1.bf16.msra.mxu0 0
        %374 = vmatprep.mubr.bf16.mxu0 0
        %375 = vmatmul.mubr.bf16.gmra.mrb[0].mxu0 %v340
        %v376 = vpop.f32.mrb[0].mxu0
        %v377 = vadd.f32 %v324, %v376
        %v378 = vpop.f32.mrb[0].mxu0
        %v379 = vpop.f32.mrb[0].mxu0
        %v380 = vpop.f32.mrb[0].mxu0
        %381 = vdwg.mxu0
        %vm382 = vcmp.gt.f32.partialorder %v377, 0.0
        %v383 = vmul.f32 %v377, 0.01
        %v384 = vsel %vm382, %v377, %v383
        %vm385 = vcmask 523264
        %386 = vst.msk [vmem:[%s288] sm:$0xff] %vm385, %v384
        %v387 = vld [vmem:[%s6] sm:$0x1]
        %v388 = vsel %vm385, %v384, 0.0
        %v389 = vrot.slane %v388, 4
        %v390 = vadd.f32 %v388, %v389
        %v391 = vrot.slane %v390, 2
        %v392 = vadd.f32 %v390, %v391
        %v393 = vrot.slane %v392, 1
        %v394 = vadd.f32 %v392, %v393
        %v395 = vadd.f32 %v387, %v394
        %vm396 = vcmask 516096
        %397 = vst.msk [vmem:[%s6] sm:$0x1] %vm396, %v395
        %v398 = vld [vmem:[%s7] sm:$0x1]
        %v399 = vmul.f32 %v384, %v384
        %v400 = vsel %vm385, %v399, 0.0
        %v401 = vrot.slane %v400, 4
        %v402 = vadd.f32 %v400, %v401
        %v403 = vrot.slane %v402, 2
        %v404 = vadd.f32 %v402, %v403
        %v405 = vrot.slane %v404, 1
        %v406 = vadd.f32 %v404, %v405
        %v407 = vadd.f32 %v398, %v406
        %408 = vst.msk [vmem:[%s7] sm:$0x1] %vm396, %v407
        %p409 = scmp.lt.s32.totalorder %s22, 3
        %s410 = scalar_select %p409, %s22, 3
        %s411 = smul.addr %s410, 8
        %s412 = scalar_lea.vmem %s5, %s411
        // Predicated region
        $region49: #{generator_forward.4} parent=39 // pred_check
          %p413 = pneg %p150
        $region50: #{generator_forward.4} parent=39 // pred_check_branch
          %415 = sbr.rel (%p413) target = $region52
        $region51: #{generator_forward.4} parent=39 // pred_region
          _
        $region52: #{generator_forward.4} parent=39 // pred_fallthru
          _
        // Predicated region
        $region53: #{generator_forward.4} parent=39 // pred_check
          %p416 = pneg %p171
        $region54: #{generator_forward.4} parent=39 // pred_check_branch
          %418 = sbr.rel (%p416) target = $region56
        $region55: #{generator_forward.4} parent=39 // pred_region
          _
        $region56: #{generator_forward.4} parent=39 // pred_fallthru
          _
        // Predicated region
        $region57: #{generator_forward.4} parent=39 // pred_check
          %p419 = pneg %p192
        $region58: #{generator_forward.4} parent=39 // pred_check_branch
          %421 = sbr.rel (%p419) target = $region60
        $region59: #{generator_forward.4} parent=39 // pred_region
          _
        $region60: #{generator_forward.4} parent=39 // pred_fallthru
          _
        // Predicated region
        $region61: #{generator_forward.4} parent=39 // pred_check
          %p422 = pneg %p171
        $region62: #{generator_forward.4} parent=39 // pred_check_branch
          %424 = sbr.rel (%p422) target = $region64
        $region63: #{generator_forward.4} parent=39 // pred_region
          _
        $region64: #{generator_forward.4} parent=39 // pred_fallthru
          _
        // Predicated region
        $region65: #{generator_forward.4} parent=39 // pred_check
          %p425 = pneg %p192
        $region66: #{generator_forward.4} parent=39 // pred_check_branch
          %427 = sbr.rel (%p425) target = $region68
        $region67: #{generator_forward.4} parent=39 // pred_region
          _
        $region68: #{generator_forward.4} parent=39 // pred_fallthru
          _
      $region40: #{generator_forward.4} parent=5 // pred_fallthru
        _
      %p428 = scmp.le.s32.totalorder 2, %s17
      // Predicated region
      $region69: #{generator_forward.4} parent=5 // pred_check
        %p429 = pneg %p428
      $region70: #{generator_forward.4} parent=5 // pred_check_branch
        %431 = sbr.rel (%p429) target = $region72
      $region71: #{generator_forward.4} parent=5 // pred_region
        %s432 = ssub.s32 %s17, 2
        // Predicated region
        $region73: #{generator_forward.4} parent=71 // pred_check
          %p433 = pneg %p156
        $region74: #{generator_forward.4} parent=71 // pred_check_branch
          %435 = sbr.rel (%p433) target = $region76
        $region75: #{generator_forward.4} parent=71 // pred_region
          %p436 = scmp.lt.s32.totalorder %s23, 3
          %s437 = scalar_select %p436, %s23, 3
          %s438 = smul.addr %s437, 8
          %s439 = scalar_lea.vmem %s5, %s438
        $region76: #{generator_forward.4} parent=71 // pred_fallthru
          _
      $region72: #{generator_forward.4} parent=5 // pred_fallthru
        _
    $region6: #{generator_forward.4} parent=1 // loop_footer
      %s21 = sadd.s32 1, %s17
    $region7: #{generator_forward.4} parent=1 // loop_footer_branch
      %16 = sbr.rel target = $region3
    $region8: #{generator_forward.4} parent=1 // loop_exit
      _
    %440 = vsyncpa [#allocation3], 1
    %s441 = scalar_lea.sflag [#allocation3], 1
    %442 = vsyncpa %s441, 1

// kernel: generator_forward.5
$region0: #{generator_forward.5}
  #allocation0 [shape = 'u32[]', space=smem, size = 0x4, offset = 0x4, fixed_abs, tag = 'smem constant byte address 0x4 - core index']
  #allocation1 [shape = 'u32[144,128]{1,0:T(1,128)}', space=vmem, size = 0x12000, scoped, tag = 'internal scratch']
  %s0 = inlined_call_operand.vmem [shape: f32[32,64], index: 0, kind: input, shape index: {}]
  %s1 = inlined_call_operand.vmem [shape: f32[1,64], index: 1, kind: input, shape index: {}]
  %s2 = inlined_call_operand.vmem [shape: f32[1,64], index: 2, kind: input, shape index: {}]
  %s3 = inlined_call_operand.vmem [shape: bf16[64,64], index: 3, kind: input, shape index: {}]
  %s4 = inlined_call_operand.vmem [shape: f32[1,64], index: 4, kind: input, shape index: {}]
  %s5 = inlined_call_operand.vmem [shape: f32[32,64], index: 5, kind: output, shape index: {0}]
  %s6 = inlined_call_operand.vmem [shape: f32[1,64], index: 6, kind: output, shape index: {1}]
  %s7 = inlined_call_operand.vmem [shape: f32[1,64], index: 7, kind: output, shape index: {2}]
  %8 = xla_tuple %s5, %s6, %s7
  %s9 = sld [smem:[#allocation0]]
  $region73: #{generator_forward.5} parent=0
    _
  %s11 = ssub.s32 1, %s9
  %s12 = scalar_select 0, %s11, %s9
  loop: start=0, step=1, limit=6
  $region2: #{generator_forward.5} parent=0 // loop_pre_header
    _
  $region3: #{generator_forward.5} parent=0 // loop_header
    %s14 = sphi 0, %s18
    %p15 = scmp.ge.s32.totalorder %s14, 6
    %s24 = sphi 0, %s26
    %s27 = sphi 0, %s24
    %s28 = sphi 0, %s27
    %s44 = sphi 0, %s28
    %s48 = sphi 0, %s48
    %s50 = sphi 0, %s48
    %s51 = sphi 0, %s50
    %s65 = sphi 0, %s51
    %s69 = sphi 0, %s69
    %s71 = sphi 0, %s69
    %s72 = sphi 0, %s71
    %s86 = sphi 0, %s72
    %s90 = sphi 0, %s90
    %s92 = sphi 0, %s90
    %s93 = sphi 0, %s92
    %s107 = sphi 0, %s93
    %s111 = sphi 0, %s111
    %s113 = sphi 0, %s111
    %s114 = sphi 0, %s113
    %s128 = sphi 0, %s114
    %s134 = sphi 0, %s136
    %s137 = sphi 0, %s134
    %s138 = sphi 0, %s137
    %s154 = sphi 0, %s138
    %s158 = sphi 0, %s158
    %s160 = sphi 0, %s158
    %s161 = sphi 0, %s160
    %s175 = sphi 0, %s161
    %s179 = sphi 0, %s179
    %s181 = sphi 0, %s179
    %s182 = sphi 0, %s181
    %s196 = sphi 0, %s182
  $region4: #{generator_forward.5} parent=0 // loop_header_branch
    %17 = sbr.rel (%p15) target = $region8
  $region5: #{generator_forward.5} parent=0 // loop_body
    %s19 = ssub.s32 %s14, 1
    %s20 = ssub.s32 %s14, 2
    %s21 = sadd.s32 %s14, 1
    %s22 = ssub.s32 %s14, %s21
    %p23 = scmp.eq.s32.totalorder %s22, 0
    %s25 = sadd.s32 %s24, 1
    %s26 = scalar_select %p23, %s24, %s25
    %p29 = pneg %p23
    %p30 = scmp.eq.s32.totalorder %s14, 3
    %p31 = por %p29, %p30
    %p32 = scmp.ne.s32.totalorder %s24, %s27
    %p33 = scmp.eq.s32.totalorder %s14, 0
    %p34 = por %p32, %p33
    %p35 = scmp.ne.s32.totalorder %s24, %s27
    %p36 = scmp.eq.s32.totalorder %s19, 3
    %p37 = por %p35, %p36
    %p38 = scmp.ne.s32.totalorder %s27, %s28
    %p39 = scmp.eq.s32.totalorder %s19, 0
    %p40 = por %p38, %p39
    %p41 = scmp.ne.s32.totalorder %s27, %s28
    %p42 = scmp.eq.s32.totalorder %s20, 3
    %p43 = por %p41, %p42
    %p45 = scmp.ne.s32.totalorder %s28, %s44
    %p46 = scmp.eq.s32.totalorder %s20, 0
    %p47 = por %p45, %p46
    %s49 = sadd.s32 %s48, 1
    %p52 = scmp.eq.s32.totalorder %s14, 3
    %p53 = scmp.ne.s32.totalorder %s48, %s50
    %p54 = scmp.eq.s32.totalorder %s14, 0
    %p55 = por %p53, %p54
    %p56 = scmp.ne.s32.totalorder %s48, %s50
    %p57 = scmp.eq.s32.totalorder %s19, 3
    %p58 = por %p56, %p57
    %p59 = scmp.ne.s32.totalorder %s50, %s51
    %p60 = scmp.eq.s32.totalorder %s19, 0
    %p61 = por %p59, %p60
    %p62 = scmp.ne.s32.totalorder %s50, %s51
    %p63 = scmp.eq.s32.totalorder %s20, 3
    %p64 = por %p62, %p63
    %p66 = scmp.ne.s32.totalorder %s51, %s65
    %p67 = scmp.eq.s32.totalorder %s20, 0
    %p68 = por %p66, %p67
    %s70 = sadd.s32 %s69, 1
    %p73 = scmp.eq.s32.totalorder %s14, 3
    %p74 = scmp.ne.s32.totalorder %s69, %s71
    %p75 = scmp.eq.s32.totalorder %s14, 0
    %p76 = por %p74, %p75
    %p77 = scmp.ne.s32.totalorder %s69, %s71
    %p78 = scmp.eq.s32.totalorder %s19, 3
    %p79 = por %p77, %p78
    %p80 = scmp.ne.s32.totalorder %s71, %s72
    %p81 = scmp.eq.s32.totalorder %s19, 0
    %p82 = por %p80, %p81
    %p83 = scmp.ne.s32.totalorder %s71, %s72
    %p84 = scmp.eq.s32.totalorder %s20, 3
    %p85 = por %p83, %p84
    %p87 = scmp.ne.s32.totalorder %s72, %s86
    %p88 = scmp.eq.s32.totalorder %s20, 0
    %p89 = por %p87, %p88
    %s91 = sadd.s32 %s90, 1
    %p94 = scmp.eq.s32.totalorder %s14, 3
    %p95 = scmp.ne.s32.totalorder %s90, %s92
    %p96 = scmp.eq.s32.totalorder %s14, 0
    %p97 = por %p95, %p96
    %p98 = scmp.ne.s32.totalorder %s90, %s92
    %p99 = scmp.eq.s32.totalorder %s19, 3
    %p100 = por %p98, %p99
    %p101 = scmp.ne.s32.totalorder %s92, %s93
    %p102 = scmp.eq.s32.totalorder %s19, 0
    %p103 = por %p101, %p102
    %p104 = scmp.ne.s32.totalorder %s92, %s93
    %p105 = scmp.eq.s32.totalorder %s20, 3
    %p106 = por %p104, %p105
    %p108 = scmp.ne.s32.totalorder %s93, %s107
    %p109 = scmp.eq.s32.totalorder %s20, 0
    %p110 = por %p108, %p109
    %s112 = sadd.s32 %s111, 1
    %p115 = scmp.eq.s32.totalorder %s14, 3
    %p116 = scmp.ne.s32.totalorder %s111, %s113
    %p117 = scmp.eq.s32.totalorder %s14, 0
    %p118 = por %p116, %p117
    %p119 = scmp.ne.s32.totalorder %s111, %s113
    %p120 = scmp.eq.s32.totalorder %s19, 3
    %p121 = por %p119, %p120
    %p122 = scmp.ne.s32.totalorder %s113, %s114
    %p123 = scmp.eq.s32.totalorder %s19, 0
    %p124 = por %p122, %p123
    %p125 = scmp.ne.s32.totalorder %s113, %s114
    %p126 = scmp.eq.s32.totalorder %s20, 3
    %p127 = por %p125, %p126
    %p129 = scmp.ne.s32.totalorder %s114, %s128
    %p130 = scmp.eq.s32.totalorder %s20, 0
    %p131 = por %p129, %p130
    %s132 = ssub.s32 %s14, %s21
    %p133 = scmp.eq.s32.totalorder %s132, 0
    %s135 = sadd.s32 %s134, 1
    %s136 = scalar_select %p133, %s134, %s135
    %p139 = pneg %p133
    %p140 = scmp.eq.s32.totalorder %s14, 3
    %p141 = por %p139, %p140
    %p142 = scmp.ne.s32.totalorder %s134, %s137
    %p143 = scmp.eq.s32.totalorder %s14, 0
    %p144 = por %p142, %p143
    %p145 = scmp.ne.s32.totalorder %s134, %s137
    %p146 = scmp.eq.s32.totalorder %s19, 3
    %p147 = por %p145, %p146
    %p148 = scmp.ne.s32.totalorder %s137, %s138
    %p149 = scmp.eq.s32.totalorder %s19, 0
    %p150 = por %p148, %p149
    %p151 = scmp.ne.s32.totalorder %s137, %s138
    %p152 = scmp.eq.s32.totalorder %s20, 3
    %p153 = por %p151, %p152
    %p155 = scmp.ne.s32.totalorder %s138, %s154
    %p156 = scmp.eq.s32.totalorder %s20, 0
    %p157 = por %p155, %p156
    %s159 = sadd.s32 %s158, 1
    %p162 = scmp.eq.s32.totalorder %s14, 3
    %p163 = scmp.ne.s32.totalorder %s158, %s160
    %p164 = scmp.eq.s32.totalorder %s14, 0
    %p165 = por %p163, %p164
    %p166 = scmp.ne.s32.totalorder %s158, %s160
    %p167 = scmp.eq.s32.totalorder %s19, 3
    %p168 = por %p166, %p167
    %p169 = scmp.ne.s32.totalorder %s160, %s161
    %p170 = scmp.eq.s32.totalorder %s19, 0
    %p171 = por %p169, %p170
    %p172 = scmp.ne.s32.totalorder %s160, %s161
    %p173 = scmp.eq.s32.totalorder %s20, 3
    %p174 = por %p172, %p173
    %p176 = scmp.ne.s32.totalorder %s161, %s175
    %p177 = scmp.eq.s32.totalorder %s20, 0
    %p178 = por %p176, %p177
    %s180 = sadd.s32 %s179, 1
    %p183 = scmp.eq.s32.totalorder %s14, 3
    %p184 = scmp.ne.s32.totalorder %s179, %s181
    %p185 = scmp.eq.s32.totalorder %s14, 0
    %p186 = por %p184, %p185
    %p187 = scmp.ne.s32.totalorder %s179, %s181
    %p188 = scmp.eq.s32.totalorder %s19, 3
    %p189 = por %p187, %p188
    %p190 = scmp.ne.s32.totalorder %s181, %s182
    %p191 = scmp.eq.s32.totalorder %s19, 0
    %p192 = por %p190, %p191
    %p193 = scmp.ne.s32.totalorder %s181, %s182
    %p194 = scmp.eq.s32.totalorder %s20, 3
    %p195 = por %p193, %p194
    %p197 = scmp.ne.s32.totalorder %s182, %s196
    %p198 = scmp.eq.s32.totalorder %s20, 0
    %p199 = por %p197, %p198
    %p200 = scmp.le.s32.totalorder 1, %s14
    %p201 = scmp.lt.s32.totalorder %s14, 5
    %p202 = pnand %p200, %p201
    %p203 = pneg %p202
    // Predicated region
    $region9: #{generator_forward.5} parent=5 // pred_check
      _
    $region10: #{generator_forward.5} parent=5 // pred_check_branch
      %205 = sbr.rel (%p202) target = $region12
    $region11: #{generator_forward.5} parent=5 // pred_region
      %s206 = ssub.s32 %s14, 1
      // Predicated region
      $region13: #{generator_forward.5} parent=11 // pred_check
        %p207 = pneg %p61
      $region14: #{generator_forward.5} parent=11 // pred_check_branch
        %209 = sbr.rel (%p207) target = $region16
      $region15: #{generator_forward.5} parent=11 // pred_region
        _
      $region16: #{generator_forward.5} parent=11 // pred_fallthru
        _
      // Predicated region
      $region17: #{generator_forward.5} parent=11 // pred_check
        %p210 = pneg %p82
      $region18: #{generator_forward.5} parent=11 // pred_check_branch
        %212 = sbr.rel (%p210) target = $region20
      $region19: #{generator_forward.5} parent=11 // pred_region
        _
      $region20: #{generator_forward.5} parent=11 // pred_fallthru
        _
      // Predicated region
      $region21: #{generator_forward.5} parent=11 // pred_check
        %p213 = pneg %p103
      $region22: #{generator_forward.5} parent=11 // pred_check_branch
        %215 = sbr.rel (%p213) target = $region24
      $region23: #{generator_forward.5} parent=11 // pred_region
        _
      $region24: #{generator_forward.5} parent=11 // pred_fallthru
        _
      // Predicated region
      $region25: #{generator_forward.5} parent=11 // pred_check
        %p216 = pneg %p124
      $region26: #{generator_forward.5} parent=11 // pred_check_branch
        %218 = sbr.rel (%p216) target = $region28
      $region27: #{generator_forward.5} parent=11 // pred_region
        _
      $region28: #{generator_forward.5} parent=11 // pred_fallthru
        _
    $region12: #{generator_forward.5} parent=5 // pred_fallthru
      _
    %p219 = scmp.lt.s32.totalorder %s14, 4
    // Predicated region
    $region29: #{generator_forward.5} parent=5 // pred_check
      %p220 = pneg %p219
    $region30: #{generator_forward.5} parent=5 // pred_check_branch
      %222 = sbr.rel (%p220) target = $region32
    $region31: #{generator_forward.5} parent=5 // pred_region
      // Predicated region
      $region33: #{generator_forward.5} parent=31 // pred_check
        %p223 = pneg %p34
      $region34: #{generator_forward.5} parent=31 // pred_check_branch
        %225 = sbr.rel (%p223) target = $region36
      $region35: #{generator_forward.5} parent=31 // pred_region
        %p226 = scmp.lt.s32.totalorder %s14, 3
        %s227 = scalar_select %p226, %s14, 3
        %s228 = smul.addr %s227, 8
        %s229 = scalar_lea.vmem %s0, %s228
      $region36: #{generator_forward.5} parent=31 // pred_fallthru
        _
    $region32: #{generator_forward.5} parent=5 // pred_fallthru
      _
    %p230 = scmp.le.s32.totalorder 1, %s14
    %p231 = scmp.lt.s32.totalorder %s14, 5
    %p232 = pnand %p230, %p231
    %p233 = pneg %p232
    // Predicated region
    $region37: #{generator_forward.5} parent=5 // pred_check
      _
    $region38: #{generator_forward.5} parent=5 // pred_check_branch
      %235 = sbr.rel (%p232) target = $region40
    $region39: #{generator_forward.5} parent=5 // pred_region
      %s236 = ssub.s32 %s14, 1
      %p237 = scmp.lt.s32.totalorder %s19, 3
      %s238 = scalar_select %p237, %s19, 3
      %s239 = smul.addr %s238, 8
      %s240 = scalar_lea.vmem %s0, %s239
      %p241 = pneg %p40
      %p242 = pneg %p37
      %p243 = pneg %p61
      %p244 = pneg %p58
      %p245 = pneg %p82
      %p246 = pneg %p79
      %p247 = pneg %p103
      %p248 = pneg %p100
      %p249 = pneg %p124
      %p250 = pneg %p121
      %p251 = pneg %p150
      %p252 = pneg %p147
      %p253 = scmp.lt.s32.totalorder %s19, 3
      %s254 = scalar_select %p253, %s19, 3
      %s255 = smul.addr %s254, 8
      %s256 = scalar_lea.vmem %s5, %s255
      %p257 = pneg %p171
      %p258 = pneg %p168
      %p259 = pneg %p192
      %p260 = pneg %p189
      %p261 = scmp.lt.s32.totalorder %s19, 3
      %s262 = scalar_select %p261, %s19, 3
      %s263 = smul.addr %s262, 8
      %s264 = scalar_lea.vmem %s0, %s263
      %p265 = scmp.lt.s32.totalorder %s19, 3
      %s266 = scalar_select %p265, %s19, 3
      %s267 = smul.addr %s266, 8
      %s268 = scalar_lea.vmem %s5, %s267
      %p270 = scmp.eq.s32.totalorder %s19, 0
      // Predicated region
      $region41: #{generator_forward.5} parent=39 // pred_check
        %p271 = pneg %p270
      $region42: #{generator_forward.5} parent=39 // pred_check_branch
        %273 = sbr.rel (%p271) target = $region44
      $region43: #{generator_forward.5} parent=39 // pred_region
        %vm274 = vcmask 516096
        %275 = vst.msk [vmem:[%s6] sm:$0x1] %vm274, 0.0
        %276 = vst.msk [vmem:[%s7] sm:$0x1] %vm274, 0.0
      $region44: #{generator_forward.5} parent=39 // pred_fallthru
        _
      %v277 = vld [vmem:[%s264] sm:$0xff]
      %v278 = vld [vmem:[%s1] sm:$0x1]
      %v280 = vlaneseq
      %v281 = vshrl.u32 %v280, 7
      %v282 = vsub.s32 0, %v281
      %v283 = vrot.slane %v278, %v282
      %v285 = vmul.f32 %v277, %v283
      %v286 = vld [vmem:[%s2] sm:$0x1]
      %v288 = vlaneseq
      %v289 = vshrl.u32 %v288, 7
      %v290 = vsub.s32 0, %v289
      %v291 = vrot.slane %v286, %v290
      %v293 = vadd.f32 %v285, %v291
      %v294 = vpack.c.bf16 %v293, %v293
      %v295 = vld [vmem:[%s3] sm:$0xf]
      %v296 = vld [vmem:[%s3 + $0x4] sm:$0xf]
      %v297 = vld [vmem:[%s3 + $0x8] sm:$0xf]
      %v298 = vld [vmem:[%s3 + $0xc] sm:$0xf]
      %v299 = vld [vmem:[%s3 + $0x10] sm:$0xf]
      %v300 = vld [vmem:[%s3 + $0x14] sm:$0xf]
      %v301 = vld [vmem:[%s3 + $0x18] sm:$0xf]
      %v302 = vld [vmem:[%s3 + $0x1c] sm:$0xf]
      %v303 = vld [vmem:[%s4] sm:$0x1]
      %v305 = vlaneseq
      %v306 = vshrl.u32 %v305, 7
      %v307 = vsub.s32 0, %v306
      %v308 = vrot.slane %v303, %v307
      %v318 = vunpack.c.l.b16 %v295
      %v319 = vunpack.c.l.b16 %v296
      %v320 = vunpack.c.l.b16 %v297
      %v321 = vunpack.c.l.b16 %v298
      %v322 = vunpack.c.l.b16 %v299
      %v323 = vunpack.c.l.b16 %v300
      %v324 = vunpack.c.l.b16 %v301
      %v325 = vunpack.c.l.b16 %v302
      %v326 = vpack.c.b16 %v319, %v318
      %v327 = vpack.c.b16 %v321, %v320
      %v328 = vpack.c.b16 %v323, %v322
      %v329 = vpack.c.b16 %v325, %v324
      %vm334 = vcmask 523264
      %v336 = vsel %vm334, %v294, 0
      %338 = vmatprep.subr.bf16.mxu0 0
      %339 = vmatpush1.bf16.msra.mxu0 %v326
      %340 = vmatprep.subr.bf16.mxu0 0
      %341 = vmatpush1.bf16.msra.mxu0 %v327
      %342 = vmatprep.subr.bf16.mxu0 0
      %343 = vmatpush1.bf16.msra.mxu0 %v328
      %344 = vmatprep.subr.bf16.mxu0 0
      %345 = vmatpush1.bf16.msra.mxu0 %v329
      %346 = vmatprep.subr.bf16.mxu0 0
      %347 = vmatpush1.bf16.msra.mxu0 0
      %348 = vmatprep.subr.bf16.mxu0 0
      %349 = vmatpush1.bf16.msra.mxu0 0
      %350 = vmatprep.subr.bf16.mxu0 0
      %351 = vmatpush1.bf16.msra.mxu0 0
      %352 = vmatprep.subr.bf16.mxu0 0
      %353 = vmatpush1.bf16.msra.mxu0 0
      %354 = vmatprep.subr.bf16.mxu0 0
      %355 = vmatpush1.bf16.msra.mxu0 0
      %356 = vmatprep.subr.bf16.mxu0 0
      %357 = vmatpush1.bf16.msra.mxu0 0
      %358 = vmatprep.subr.bf16.mxu0 0
      %359 = vmatpush1.bf16.msra.mxu0 0
      %360 = vmatprep.subr.bf16.mxu0 0
      %361 = vmatpush1.bf16.msra.mxu0 0
      %362 = vmatprep.subr.bf16.mxu0 0
      %363 = vmatpush1.bf16.msra.mxu0 0
      %364 = vmatprep.subr.bf16.mxu0 0
      %365 = vmatpush1.bf16.msra.mxu0 0
      %366 = vmatprep.subr.bf16.mxu0 0
      %367 = vmatpush1.bf16.msra.mxu0 0
      %368 = vmatprep.subr.bf16.mxu0 0
      %369 = vmatpush1.bf16.msra.mxu0 0
      %370 = vmatprep.mubr.bf16.mxu0 0
      %371 = vmatmul.mubr.bf16.gmra.mrb[0].mxu0 %v336
      %v372 = vpop.f32.mrb[0].mxu0
      %v373 = vadd.f32 %v308, %v372
      %v374 = vpop.f32.mrb[0].mxu0
      %v375 = vpop.f32.mrb[0].mxu0
      %v376 = vpop.f32.mrb[0].mxu0
      %377 = vdwg.mxu0
      %vm378 = vcmp.gt.f32.partialorder %v373, 0.0
      %v379 = vmul.f32 %v373, 0.01
      %v380 = vsel %vm378, %v373, %v379
      %381 = vst.msk [vmem:[%s268] sm:$0xff] %vm334, %v380
      %v382 = vld [vmem:[%s6] sm:$0x1]
      %v383 = vsel %vm334, %v380, 0.0
      %v384 = vrot.slane %v383, 4
      %v385 = vadd.f32 %v383, %v384
      %v386 = vrot.slane %v385, 2
      %v387 = vadd.f32 %v385, %v386
      %v388 = vrot.slane %v387, 1
      %v389 = vadd.f32 %v387, %v388
      %v390 = vadd.f32 %v382, %v389
      %vm391 = vcmask 516096
      %392 = vst.msk [vmem:[%s6] sm:$0x1] %vm391, %v390
      %v393 = vld [vmem:[%s7] sm:$0x1]
      %v394 = vmul.f32 %v380, %v380
      %v395 = vsel %vm334, %v394, 0.0
      %v396 = vrot.slane %v395, 4
      %v397 = vadd.f32 %v395, %v396
      %v398 = vrot.slane %v397, 2
      %v399 = vadd.f32 %v397, %v398
      %v400 = vrot.slane %v399, 1
      %v401 = vadd.f32 %v399, %v400
      %v402 = vadd.f32 %v393, %v401
      %403 = vst.msk [vmem:[%s7] sm:$0x1] %vm391, %v402
      %p404 = scmp.lt.s32.totalorder %s19, 3
      %s405 = scalar_select %p404, %s19, 3
      %s406 = smul.addr %s405, 8
      %s407 = scalar_lea.vmem %s5, %s406
      // Predicated region
      $region45: #{generator_forward.5} parent=39 // pred_check
        %p408 = pneg %p147
      $region46: #{generator_forward.5} parent=39 // pred_check_branch
        %410 = sbr.rel (%p408) target = $region48
      $region47: #{generator_forward.5} parent=39 // pred_region
        _
      $region48: #{generator_forward.5} parent=39 // pred_fallthru
        _
      // Predicated region
      $region49: #{generator_forward.5} parent=39 // pred_check
        %p411 = pneg %p168
      $region50: #{generator_forward.5} parent=39 // pred_check_branch
        %413 = sbr.rel (%p411) target = $region52
      $region51: #{generator_forward.5} parent=39 // pred_region
        _
      $region52: #{generator_forward.5} parent=39 // pred_fallthru
        _
      // Predicated region
      $region53: #{generator_forward.5} parent=39 // pred_check
        %p414 = pneg %p189
      $region54: #{generator_forward.5} parent=39 // pred_check_branch
        %416 = sbr.rel (%p414) target = $region56
      $region55: #{generator_forward.5} parent=39 // pred_region
        _
      $region56: #{generator_forward.5} parent=39 // pred_fallthru
        _
      // Predicated region
      $region57: #{generator_forward.5} parent=39 // pred_check
        %p417 = pneg %p168
      $region58: #{generator_forward.5} parent=39 // pred_check_branch
        %419 = sbr.rel (%p417) target = $region60
      $region59: #{generator_forward.5} parent=39 // pred_region
        _
      $region60: #{generator_forward.5} parent=39 // pred_fallthru
        _
      // Predicated region
      $region61: #{generator_forward.5} parent=39 // pred_check
        %p420 = pneg %p189
      $region62: #{generator_forward.5} parent=39 // pred_check_branch
        %422 = sbr.rel (%p420) target = $region64
      $region63: #{generator_forward.5} parent=39 // pred_region
        _
      $region64: #{generator_forward.5} parent=39 // pred_fallthru
        _
    $region40: #{generator_forward.5} parent=5 // pred_fallthru
      _
    %p423 = scmp.le.s32.totalorder 2, %s14
    // Predicated region
    $region65: #{generator_forward.5} parent=5 // pred_check
      %p424 = pneg %p423
    $region66: #{generator_forward.5} parent=5 // pred_check_branch
      %426 = sbr.rel (%p424) target = $region68
    $region67: #{generator_forward.5} parent=5 // pred_region
      %s427 = ssub.s32 %s14, 2
      // Predicated region
      $region69: #{generator_forward.5} parent=67 // pred_check
        %p428 = pneg %p153
      $region70: #{generator_forward.5} parent=67 // pred_check_branch
        %430 = sbr.rel (%p428) target = $region72
      $region71: #{generator_forward.5} parent=67 // pred_region
        %p431 = scmp.lt.s32.totalorder %s20, 3
        %s432 = scalar_select %p431, %s20, 3
        %s433 = smul.addr %s432, 8
        %s434 = scalar_lea.vmem %s5, %s433
      $region72: #{generator_forward.5} parent=67 // pred_fallthru
        _
    $region68: #{generator_forward.5} parent=5 // pred_fallthru
      _
  $region6: #{generator_forward.5} parent=0 // loop_footer
    %s18 = sadd.s32 1, %s14
  $region7: #{generator_forward.5} parent=0 // loop_footer_branch
    %13 = sbr.rel target = $region3
  $region8: #{generator_forward.5} parent=0 // loop_exit
    _

// kernel: generator_forward.7
$region0: #{generator_forward.7}
  #allocation0 [shape = 'u32[]', space=smem, size = 0x4, offset = 0x4, fixed_abs, tag = 'smem constant byte address 0x4 - core index']
  #allocation1 [shape = 'u32[144,128]{1,0:T(1,128)}', space=vmem, size = 0x12000, scoped, tag = 'internal scratch']
  %s0 = inlined_call_operand.vmem [shape: f32[32,128], index: 0, kind: input, shape index: {}]
  %s1 = inlined_call_operand.vmem [shape: f32[1,128], index: 1, kind: input, shape index: {}]
  %s2 = inlined_call_operand.vmem [shape: f32[1,128], index: 2, kind: input, shape index: {}]
  %s3 = inlined_call_operand.vmem [shape: bf16[128,128], index: 3, kind: input, shape index: {}]
  %s4 = inlined_call_operand.vmem [shape: f32[1,128], index: 4, kind: input, shape index: {}]
  %s5 = inlined_call_operand.hbm [shape: f32[32,128], index: 5, kind: output, shape index: {}]
  %s6 = sld [smem:[#allocation0]]
  $region53: #{generator_forward.7} parent=0
    _
  %s8 = ssub.s32 1, %s6
  %s9 = scalar_select 0, %s8, %s6
  $region1: #{generator_forward.7} parent=0
    #allocation2 [shape = 'u8[8192]{0}', space=vmem, size = 0x2000, scoped, tag = 'output window, operand 0']
    #allocation3 [shape = 's32[2]{0}', space=sflag, size = 0x8, scoped, tag = 'scoped memory for generator_forward.7']
    %10 = vsyncpa [#allocation3], 0
    %s11 = scalar_lea.sflag [#allocation3], 1
    %12 = vsyncpa %s11, 0
    loop: start=0, step=1, limit=6
    $region2: #{generator_forward.7} parent=1 // loop_pre_header
      _
    $region3: #{generator_forward.7} parent=1 // loop_header
      %s14 = sphi 0, %s18
      %p15 = scmp.ge.s32.totalorder %s14, 6
      %s24 = sphi 0, %s26
      %s27 = sphi 0, %s24
      %s28 = sphi 0, %s27
      %s44 = sphi 0, %s28
      %s48 = sphi 0, %s48
      %s50 = sphi 0, %s48
      %s51 = sphi 0, %s50
      %s65 = sphi 0, %s51
      %s69 = sphi 0, %s69
      %s71 = sphi 0, %s69
      %s72 = sphi 0, %s71
      %s86 = sphi 0, %s72
      %s90 = sphi 0, %s90
      %s92 = sphi 0, %s90
      %s93 = sphi 0, %s92
      %s107 = sphi 0, %s93
      %s111 = sphi 0, %s111
      %s113 = sphi 0, %s111
      %s114 = sphi 0, %s113
      %s128 = sphi 0, %s114
      %s134 = sphi 0, %s136
      %s137 = sphi 0, %s134
      %s138 = sphi 0, %s137
      %s154 = sphi 0, %s138
    $region4: #{generator_forward.7} parent=1 // loop_header_branch
      %17 = sbr.rel (%p15) target = $region8
    $region5: #{generator_forward.7} parent=1 // loop_body
      %s19 = ssub.s32 %s14, 1
      %s20 = ssub.s32 %s14, 2
      %s21 = sadd.s32 %s14, 1
      %s22 = ssub.s32 %s14, %s21
      %p23 = scmp.eq.s32.totalorder %s22, 0
      %s25 = sadd.s32 %s24, 1
      %s26 = scalar_select %p23, %s24, %s25
      %p29 = pneg %p23
      %p30 = scmp.eq.s32.totalorder %s14, 3
      %p31 = por %p29, %p30
      %p32 = scmp.ne.s32.totalorder %s24, %s27
      %p33 = scmp.eq.s32.totalorder %s14, 0
      %p34 = por %p32, %p33
      %p35 = scmp.ne.s32.totalorder %s24, %s27
      %p36 = scmp.eq.s32.totalorder %s19, 3
      %p37 = por %p35, %p36
      %p38 = scmp.ne.s32.totalorder %s27, %s28
      %p39 = scmp.eq.s32.totalorder %s19, 0
      %p40 = por %p38, %p39
      %p41 = scmp.ne.s32.totalorder %s27, %s28
      %p42 = scmp.eq.s32.totalorder %s20, 3
      %p43 = por %p41, %p42
      %p45 = scmp.ne.s32.totalorder %s28, %s44
      %p46 = scmp.eq.s32.totalorder %s20, 0
      %p47 = por %p45, %p46
      %s49 = sadd.s32 %s48, 1
      %p52 = scmp.eq.s32.totalorder %s14, 3
      %p53 = scmp.ne.s32.totalorder %s48, %s50
      %p54 = scmp.eq.s32.totalorder %s14, 0
      %p55 = por %p53, %p54
      %p56 = scmp.ne.s32.totalorder %s48, %s50
      %p57 = scmp.eq.s32.totalorder %s19, 3
      %p58 = por %p56, %p57
      %p59 = scmp.ne.s32.totalorder %s50, %s51
      %p60 = scmp.eq.s32.totalorder %s19, 0
      %p61 = por %p59, %p60
      %p62 = scmp.ne.s32.totalorder %s50, %s51
      %p63 = scmp.eq.s32.totalorder %s20, 3
      %p64 = por %p62, %p63
      %p66 = scmp.ne.s32.totalorder %s51, %s65
      %p67 = scmp.eq.s32.totalorder %s20, 0
      %p68 = por %p66, %p67
      %s70 = sadd.s32 %s69, 1
      %p73 = scmp.eq.s32.totalorder %s14, 3
      %p74 = scmp.ne.s32.totalorder %s69, %s71
      %p75 = scmp.eq.s32.totalorder %s14, 0
      %p76 = por %p74, %p75
      %p77 = scmp.ne.s32.totalorder %s69, %s71
      %p78 = scmp.eq.s32.totalorder %s19, 3
      %p79 = por %p77, %p78
      %p80 = scmp.ne.s32.totalorder %s71, %s72
      %p81 = scmp.eq.s32.totalorder %s19, 0
      %p82 = por %p80, %p81
      %p83 = scmp.ne.s32.totalorder %s71, %s72
      %p84 = scmp.eq.s32.totalorder %s20, 3
      %p85 = por %p83, %p84
      %p87 = scmp.ne.s32.totalorder %s72, %s86
      %p88 = scmp.eq.s32.totalorder %s20, 0
      %p89 = por %p87, %p88
      %s91 = sadd.s32 %s90, 1
      %p94 = scmp.eq.s32.totalorder %s14, 3
      %p95 = scmp.ne.s32.totalorder %s90, %s92
      %p96 = scmp.eq.s32.totalorder %s14, 0
      %p97 = por %p95, %p96
      %p98 = scmp.ne.s32.totalorder %s90, %s92
      %p99 = scmp.eq.s32.totalorder %s19, 3
      %p100 = por %p98, %p99
      %p101 = scmp.ne.s32.totalorder %s92, %s93
      %p102 = scmp.eq.s32.totalorder %s19, 0
      %p103 = por %p101, %p102
      %p104 = scmp.ne.s32.totalorder %s92, %s93
      %p105 = scmp.eq.s32.totalorder %s20, 3
      %p106 = por %p104, %p105
      %p108 = scmp.ne.s32.totalorder %s93, %s107
      %p109 = scmp.eq.s32.totalorder %s20, 0
      %p110 = por %p108, %p109
      %s112 = sadd.s32 %s111, 1
      %p115 = scmp.eq.s32.totalorder %s14, 3
      %p116 = scmp.ne.s32.totalorder %s111, %s113
      %p117 = scmp.eq.s32.totalorder %s14, 0
      %p118 = por %p116, %p117
      %p119 = scmp.ne.s32.totalorder %s111, %s113
      %p120 = scmp.eq.s32.totalorder %s19, 3
      %p121 = por %p119, %p120
      %p122 = scmp.ne.s32.totalorder %s113, %s114
      %p123 = scmp.eq.s32.totalorder %s19, 0
      %p124 = por %p122, %p123
      %p125 = scmp.ne.s32.totalorder %s113, %s114
      %p126 = scmp.eq.s32.totalorder %s20, 3
      %p127 = por %p125, %p126
      %p129 = scmp.ne.s32.totalorder %s114, %s128
      %p130 = scmp.eq.s32.totalorder %s20, 0
      %p131 = por %p129, %p130
      %s132 = ssub.s32 %s14, %s21
      %p133 = scmp.eq.s32.totalorder %s132, 0
      %s135 = sadd.s32 %s134, 1
      %s136 = scalar_select %p133, %s134, %s135
      %p139 = pneg %p133
      %p140 = scmp.eq.s32.totalorder %s14, 3
      %p141 = por %p139, %p140
      %p142 = scmp.ne.s32.totalorder %s134, %s137
      %p143 = scmp.eq.s32.totalorder %s14, 0
      %p144 = por %p142, %p143
      %p145 = scmp.ne.s32.totalorder %s134, %s137
      %p146 = scmp.eq.s32.totalorder %s19, 3
      %p147 = por %p145, %p146
      %p148 = scmp.ne.s32.totalorder %s137, %s138
      %p149 = scmp.eq.s32.totalorder %s19, 0
      %p150 = por %p148, %p149
      %p151 = scmp.ne.s32.totalorder %s137, %s138
      %p152 = scmp.eq.s32.totalorder %s20, 3
      %p153 = por %p151, %p152
      %p155 = scmp.ne.s32.totalorder %s138, %s154
      %p156 = scmp.eq.s32.totalorder %s20, 0
      %p157 = por %p155, %p156
      %p158 = scmp.le.s32.totalorder 1, %s14
      %p159 = scmp.lt.s32.totalorder %s14, 5
      %p160 = pnand %p158, %p159
      %p161 = pneg %p160
      // Predicated region
      $region9: #{generator_forward.7} parent=5 // pred_check
        _
      $region10: #{generator_forward.7} parent=5 // pred_check_branch
        %163 = sbr.rel (%p160) target = $region12
      $region11: #{generator_forward.7} parent=5 // pred_region
        %s164 = ssub.s32 %s14, 1
        // Predicated region
        $region13: #{generator_forward.7} parent=11 // pred_check
          %p165 = pneg %p61
        $region14: #{generator_forward.7} parent=11 // pred_check_branch
          %167 = sbr.rel (%p165) target = $region16
        $region15: #{generator_forward.7} parent=11 // pred_region
          _
        $region16: #{generator_forward.7} parent=11 // pred_fallthru
          _
        // Predicated region
        $region17: #{generator_forward.7} parent=11 // pred_check
          %p168 = pneg %p82
        $region18: #{generator_forward.7} parent=11 // pred_check_branch
          %170 = sbr.rel (%p168) target = $region20
        $region19: #{generator_forward.7} parent=11 // pred_region
          _
        $region20: #{generator_forward.7} parent=11 // pred_fallthru
          _
        // Predicated region
        $region21: #{generator_forward.7} parent=11 // pred_check
          %p171 = pneg %p103
        $region22: #{generator_forward.7} parent=11 // pred_check_branch
          %173 = sbr.rel (%p171) target = $region24
        $region23: #{generator_forward.7} parent=11 // pred_region
          _
        $region24: #{generator_forward.7} parent=11 // pred_fallthru
          _
        // Predicated region
        $region25: #{generator_forward.7} parent=11 // pred_check
          %p174 = pneg %p124
        $region26: #{generator_forward.7} parent=11 // pred_check_branch
          %176 = sbr.rel (%p174) target = $region28
        $region27: #{generator_forward.7} parent=11 // pred_region
          _
        $region28: #{generator_forward.7} parent=11 // pred_fallthru
          _
      $region12: #{generator_forward.7} parent=5 // pred_fallthru
        _
      %p177 = scmp.lt.s32.totalorder %s14, 4
      // Predicated region
      $region29: #{generator_forward.7} parent=5 // pred_check
        %p178 = pneg %p177
      $region30: #{generator_forward.7} parent=5 // pred_check_branch
        %180 = sbr.rel (%p178) target = $region32
      $region31: #{generator_forward.7} parent=5 // pred_region
        // Predicated region
        $region33: #{generator_forward.7} parent=31 // pred_check
          %p181 = pneg %p34
        $region34: #{generator_forward.7} parent=31 // pred_check_branch
          %183 = sbr.rel (%p181) target = $region36
        $region35: #{generator_forward.7} parent=31 // pred_region
          %p184 = scmp.lt.s32.totalorder %s14, 3
          %s185 = scalar_select %p184, %s14, 3
          %s186 = smul.addr %s185, 8
          %s187 = scalar_lea.vmem %s0, %s186
        $region36: #{generator_forward.7} parent=31 // pred_fallthru
          _
      $region32: #{generator_forward.7} parent=5 // pred_fallthru
        _
      %p188 = scmp.le.s32.totalorder 1, %s14
      %p189 = scmp.lt.s32.totalorder %s14, 5
      %p190 = pnand %p188, %p189
      %p191 = pneg %p190
      // Predicated region
      $region37: #{generator_forward.7} parent=5 // pred_check
        _
      $region38: #{generator_forward.7} parent=5 // pred_check_branch
        %193 = sbr.rel (%p190) target = $region40
      $region39: #{generator_forward.7} parent=5 // pred_region
        %s194 = ssub.s32 %s14, 1
        %p195 = scmp.lt.s32.totalorder %s19, 3
        %s196 = scalar_select %p195, %s19, 3
        %s197 = smul.addr %s196, 8
        %s198 = scalar_lea.vmem %s0, %s197
        %p199 = pneg %p40
        %p200 = pneg %p37
        %p201 = pneg %p61
        %p202 = pneg %p58
        %p203 = pneg %p82
        %p204 = pneg %p79
        %p205 = pneg %p103
        %p206 = pneg %p100
        %p207 = pneg %p124
        %p208 = pneg %p121
        %p209 = pneg %p150
        %p210 = pneg %p147
        %s211 = sand.u32 %s137, 1
        %s212 = scalar_lea.sflag [#allocation3], %s211
        %s213 = sand.u32 %s137, 1
        %s214 = smul.addr %s213, 8
        %s215 = scalar_lea.vmem [#allocation2], %s214
        %p216 = scmp.lt.s32.totalorder %s19, 3
        %s217 = scalar_select %p216, %s19, 3
        %s218 = smul.addr %s217, 8
        %s219 = scalar_lea.vmem %s0, %s218
        %v221 = vld [vmem:[%s219] sm:$0xff]
        %v222 = vld [vmem:[%s1] sm:$0x1]
        %v224 = vlaneseq
        %v225 = vshrl.u32 %v224, 7
        %v226 = vsub.s32 0, %v225
        %v227 = vrot.slane %v222, %v226
        %v229 = vmul.f32 %v221, %v227
        %v230 = vld [vmem:[%s2] sm:$0x1]
        %v232 = vlaneseq
        %v233 = vshrl.u32 %v232, 7
        %v234 = vsub.s32 0, %v233
        %v235 = vrot.slane %v230, %v234
        %v237 = vadd.f32 %v229, %v235
        %v238 = vpack.c.bf16 %v237, %v237
        %v239 = vld [vmem:[%s3] sm:$0xf]
        %v240 = vld [vmem:[%s3 + $0x4] sm:$0xf]
        %v241 = vld [vmem:[%s3 + $0x8] sm:$0xf]
        %v242 = vld [vmem:[%s3 + $0xc] sm:$0xf]
        %v243 = vld [vmem:[%s3 + $0x10] sm:$0xf]
        %v244 = vld [vmem:[%s3 + $0x14] sm:$0xf]
        %v245 = vld [vmem:[%s3 + $0x18] sm:$0xf]
        %v246 = vld [vmem:[%s3 + $0x1c] sm:$0xf]
        %v247 = vld [vmem:[%s3 + $0x20] sm:$0xf]
        %v248 = vld [vmem:[%s3 + $0x24] sm:$0xf]
        %v249 = vld [vmem:[%s3 + $0x28] sm:$0xf]
        %v250 = vld [vmem:[%s3 + $0x2c] sm:$0xf]
        %v251 = vld [vmem:[%s3 + $0x30] sm:$0xf]
        %v252 = vld [vmem:[%s3 + $0x34] sm:$0xf]
        %v253 = vld [vmem:[%s3 + $0x38] sm:$0xf]
        %v254 = vld [vmem:[%s3 + $0x3c] sm:$0xf]
        %v255 = vld [vmem:[%s4] sm:$0x1]
        %v257 = vlaneseq
        %v258 = vshrl.u32 %v257, 7
        %v259 = vsub.s32 0, %v258
        %v260 = vrot.slane %v255, %v259
        %v278 = vunpack.c.l.b16 %v239
        %v279 = vunpack.c.l.b16 %v240
        %v280 = vunpack.c.l.b16 %v241
        %v281 = vunpack.c.l.b16 %v242
        %v282 = vunpack.c.l.b16 %v243
        %v283 = vunpack.c.l.b16 %v244
        %v284 = vunpack.c.l.b16 %v245
        %v285 = vunpack.c.l.b16 %v246
        %v286 = vunpack.c.l.b16 %v247
        %v287 = vunpack.c.l.b16 %v248
        %v288 = vunpack.c.l.b16 %v249
        %v289 = vunpack.c.l.b16 %v250
        %v290 = vunpack.c.l.b16 %v251
        %v291 = vunpack.c.l.b16 %v252
        %v292 = vunpack.c.l.b16 %v253
        %v293 = vunpack.c.l.b16 %v254
        %v294 = vpack.c.b16 %v279, %v278
        %v295 = vpack.c.b16 %v281, %v280
        %v296 = vpack.c.b16 %v283, %v282
        %v297 = vpack.c.b16 %v285, %v284
        %v298 = vpack.c.b16 %v287, %v286
        %v299 = vpack.c.b16 %v289, %v288
        %v300 = vpack.c.b16 %v291, %v290
        %v301 = vpack.c.b16 %v293, %v292
        %310 = vmatprep.subr.bf16.mxu0 0
        %311 = vmatpush1.bf16.msra.mxu0 %v294
        %312 = vmatprep.subr.bf16.mxu0 0
        %313 = vmatpush1.bf16.msra.mxu0 %v295
        %314 = vmatprep.subr.bf16.mxu0 0
        %315 = vmatpush1.bf16.msra.mxu0 %v296
        %316 = vmatprep.subr.bf16.mxu0 0
        %317 = vmatpush1.bf16.msra.mxu0 %v297
        %318 = vmatprep.subr.bf16.mxu0 0
        %319 = vmatpush1.bf16.msra.mxu0 %v298
        %320 = vmatprep.subr.bf16.mxu0 0
        %321 = vmatpush1.bf16.msra.mxu0 %v299
        %322 = vmatprep.subr.bf16.mxu0 0
        %323 = vmatpush1.bf16.msra.mxu0 %v300
        %324 = vmatprep.subr.bf16.mxu0 0
        %325 = vmatpush1.bf16.msra.mxu0 %v301
        %326 = vmatprep.subr.bf16.mxu0 0
        %327 = vmatpush1.bf16.msra.mxu0 0
        %328 = vmatprep.subr.bf16.mxu0 0
        %329 = vmatpush1.bf16.msra.mxu0 0
        %330 = vmatprep.subr.bf16.mxu0 0
        %331 = vmatpush1.bf16.msra.mxu0 0
        %332 = vmatprep.subr.bf16.mxu0 0
        %333 = vmatpush1.bf16.msra.mxu0 0
        %334 = vmatprep.subr.bf16.mxu0 0
        %335 = vmatpush1.bf16.msra.mxu0 0
        %336 = vmatprep.subr.bf16.mxu0 0
        %337 = vmatpush1.bf16.msra.mxu0 0
        %338 = vmatprep.subr.bf16.mxu0 0
        %339 = vmatpush1.bf16.msra.mxu0 0
        %340 = vmatprep.subr.bf16.mxu0 0
        %341 = vmatpush1.bf16.msra.mxu0 0
        %342 = vmatprep.mubr.bf16.mxu0 0
        %343 = vmatmul.mubr.bf16.gmra.mrb[0].mxu0 %v238
        %v344 = vpop.f32.mrb[0].mxu0
        %v345 = vadd.f32 %v260, %v344
        %v346 = vpop.f32.mrb[0].mxu0
        %v347 = vpop.f32.mrb[0].mxu0
        %v348 = vpop.f32.mrb[0].mxu0
        %349 = vdwg.mxu0
        %vm350 = vcmp.gt.f32.partialorder %v345, 0.0
        %v351 = vmul.f32 %v345, 0.01
        %v352 = vsel %vm350, %v345, %v351
        %353 = vst [vmem:[%s215] sm:$0xff] %v352
        %s354 = sand.u32 %s137, 1
        %s355 = scalar_lea.sflag [#allocation3], %s354
        %s356 = sand.u32 %s137, 1
        %s357 = smul.addr %s356, 8
        %s358 = scalar_lea.vmem [#allocation2], %s357
        // Predicated region
        $region41: #{generator_forward.7} parent=39 // pred_check
          %p359 = pneg %p147
        $region42: #{generator_forward.7} parent=39 // pred_check_branch
          %361 = sbr.rel (%p359) target = $region44
        $region43: #{generator_forward.7} parent=39 // pred_region
          %s363 = ssub.s32 128, 128
          %364 = vsyncadd %s355, %s363
          %s365 = smul.addr %s19, 128
          %s366 = scalar_lea.hbm %s5, %s365
          %s368 = sshll.u32 %s358, 4
          %s369 = int_to_ptr.vmem [resolvable:$true] %s368
          %371 = dma.vmem_to_hbm [thread:$0]  %s369, 128, %s366, %s355
        $region44: #{generator_forward.7} parent=39 // pred_fallthru
          _
      $region40: #{generator_forward.7} parent=5 // pred_fallthru
        _
      %p372 = scmp.le.s32.totalorder 2, %s14
      // Predicated region
      $region45: #{generator_forward.7} parent=5 // pred_check
        %p373 = pneg %p372
      $region46: #{generator_forward.7} parent=5 // pred_check_branch
        %375 = sbr.rel (%p373) target = $region48
      $region47: #{generator_forward.7} parent=5 // pred_region
        %s376 = ssub.s32 %s14, 2
        // Predicated region
        $region49: #{generator_forward.7} parent=47 // pred_check
          %p377 = pneg %p153
        $region50: #{generator_forward.7} parent=47 // pred_check_branch
          %379 = sbr.rel (%p377) target = $region52
        $region51: #{generator_forward.7} parent=47 // pred_region
          %s380 = sand.u32 %s138, 1
          %s381 = scalar_lea.sflag [#allocation3], %s380
          %s382 = sand.u32 %s138, 1
          %s383 = smul.addr %s382, 8
          %s384 = scalar_lea.vmem [#allocation2], %s383
          %385 = dma.done %s381, 128
        $region52: #{generator_forward.7} parent=47 // pred_fallthru
          _
      $region48: #{generator_forward.7} parent=5 // pred_fallthru
        _
    $region6: #{generator_forward.7} parent=1 // loop_footer
      %s18 = sadd.s32 1, %s14
    $region7: #{generator_forward.7} parent=1 // loop_footer_branch
      %13 = sbr.rel target = $region3
    $region8: #{generator_forward.7} parent=1 // loop_exit
      _
    %386 = vsyncpa [#allocation3], 1
    %s387 = scalar_lea.sflag [#allocation3], 1
    %388 = vsyncpa %s387, 1

// kernel: generator_forward.6
$region0: #{generator_forward.6}
  #allocation0 [shape = 'u32[]', space=smem, size = 0x4, offset = 0x4, fixed_abs, tag = 'smem constant byte address 0x4 - core index']
  #allocation1 [shape = 'u32[144,128]{1,0:T(1,128)}', space=vmem, size = 0x12000, scoped, tag = 'internal scratch']
  %s0 = inlined_call_operand.vmem [shape: f32[32,64], index: 0, kind: input, shape index: {}]
  %s1 = inlined_call_operand.vmem [shape: f32[1,64], index: 1, kind: input, shape index: {}]
  %s2 = inlined_call_operand.vmem [shape: f32[1,64], index: 2, kind: input, shape index: {}]
  %s3 = inlined_call_operand.vmem [shape: bf16[64,128], index: 3, kind: input, shape index: {}]
  %s4 = inlined_call_operand.vmem [shape: f32[1,128], index: 4, kind: input, shape index: {}]
  %s5 = inlined_call_operand.vmem [shape: f32[32,128], index: 5, kind: output, shape index: {0}]
  %s6 = inlined_call_operand.vmem [shape: f32[1,128], index: 6, kind: output, shape index: {1}]
  %s7 = inlined_call_operand.vmem [shape: f32[1,128], index: 7, kind: output, shape index: {2}]
  %8 = xla_tuple %s5, %s6, %s7
  %s9 = sld [smem:[#allocation0]]
  $region73: #{generator_forward.6} parent=0
    _
  %s11 = ssub.s32 1, %s9
  %s12 = scalar_select 0, %s11, %s9
  loop: start=0, step=1, limit=6
  $region2: #{generator_forward.6} parent=0 // loop_pre_header
    _
  $region3: #{generator_forward.6} parent=0 // loop_header
    %s14 = sphi 0, %s18
    %p15 = scmp.ge.s32.totalorder %s14, 6
    %s24 = sphi 0, %s26
    %s27 = sphi 0, %s24
    %s28 = sphi 0, %s27
    %s44 = sphi 0, %s28
    %s48 = sphi 0, %s48
    %s50 = sphi 0, %s48
    %s51 = sphi 0, %s50
    %s65 = sphi 0, %s51
    %s69 = sphi 0, %s69
    %s71 = sphi 0, %s69
    %s72 = sphi 0, %s71
    %s86 = sphi 0, %s72
    %s90 = sphi 0, %s90
    %s92 = sphi 0, %s90
    %s93 = sphi 0, %s92
    %s107 = sphi 0, %s93
    %s111 = sphi 0, %s111
    %s113 = sphi 0, %s111
    %s114 = sphi 0, %s113
    %s128 = sphi 0, %s114
    %s134 = sphi 0, %s136
    %s137 = sphi 0, %s134
    %s138 = sphi 0, %s137
    %s154 = sphi 0, %s138
    %s158 = sphi 0, %s158
    %s160 = sphi 0, %s158
    %s161 = sphi 0, %s160
    %s175 = sphi 0, %s161
    %s179 = sphi 0, %s179
    %s181 = sphi 0, %s179
    %s182 = sphi 0, %s181
    %s196 = sphi 0, %s182
  $region4: #{generator_forward.6} parent=0 // loop_header_branch
    %17 = sbr.rel (%p15) target = $region8
  $region5: #{generator_forward.6} parent=0 // loop_body
    %s19 = ssub.s32 %s14, 1
    %s20 = ssub.s32 %s14, 2
    %s21 = sadd.s32 %s14, 1
    %s22 = ssub.s32 %s14, %s21
    %p23 = scmp.eq.s32.totalorder %s22, 0
    %s25 = sadd.s32 %s24, 1
    %s26 = scalar_select %p23, %s24, %s25
    %p29 = pneg %p23
    %p30 = scmp.eq.s32.totalorder %s14, 3
    %p31 = por %p29, %p30
    %p32 = scmp.ne.s32.totalorder %s24, %s27
    %p33 = scmp.eq.s32.totalorder %s14, 0
    %p34 = por %p32, %p33
    %p35 = scmp.ne.s32.totalorder %s24, %s27
    %p36 = scmp.eq.s32.totalorder %s19, 3
    %p37 = por %p35, %p36
    %p38 = scmp.ne.s32.totalorder %s27, %s28
    %p39 = scmp.eq.s32.totalorder %s19, 0
    %p40 = por %p38, %p39
    %p41 = scmp.ne.s32.totalorder %s27, %s28
    %p42 = scmp.eq.s32.totalorder %s20, 3
    %p43 = por %p41, %p42
    %p45 = scmp.ne.s32.totalorder %s28, %s44
    %p46 = scmp.eq.s32.totalorder %s20, 0
    %p47 = por %p45, %p46
    %s49 = sadd.s32 %s48, 1
    %p52 = scmp.eq.s32.totalorder %s14, 3
    %p53 = scmp.ne.s32.totalorder %s48, %s50
    %p54 = scmp.eq.s32.totalorder %s14, 0
    %p55 = por %p53, %p54
    %p56 = scmp.ne.s32.totalorder %s48, %s50
    %p57 = scmp.eq.s32.totalorder %s19, 3
    %p58 = por %p56, %p57
    %p59 = scmp.ne.s32.totalorder %s50, %s51
    %p60 = scmp.eq.s32.totalorder %s19, 0
    %p61 = por %p59, %p60
    %p62 = scmp.ne.s32.totalorder %s50, %s51
    %p63 = scmp.eq.s32.totalorder %s20, 3
    %p64 = por %p62, %p63
    %p66 = scmp.ne.s32.totalorder %s51, %s65
    %p67 = scmp.eq.s32.totalorder %s20, 0
    %p68 = por %p66, %p67
    %s70 = sadd.s32 %s69, 1
    %p73 = scmp.eq.s32.totalorder %s14, 3
    %p74 = scmp.ne.s32.totalorder %s69, %s71
    %p75 = scmp.eq.s32.totalorder %s14, 0
    %p76 = por %p74, %p75
    %p77 = scmp.ne.s32.totalorder %s69, %s71
    %p78 = scmp.eq.s32.totalorder %s19, 3
    %p79 = por %p77, %p78
    %p80 = scmp.ne.s32.totalorder %s71, %s72
    %p81 = scmp.eq.s32.totalorder %s19, 0
    %p82 = por %p80, %p81
    %p83 = scmp.ne.s32.totalorder %s71, %s72
    %p84 = scmp.eq.s32.totalorder %s20, 3
    %p85 = por %p83, %p84
    %p87 = scmp.ne.s32.totalorder %s72, %s86
    %p88 = scmp.eq.s32.totalorder %s20, 0
    %p89 = por %p87, %p88
    %s91 = sadd.s32 %s90, 1
    %p94 = scmp.eq.s32.totalorder %s14, 3
    %p95 = scmp.ne.s32.totalorder %s90, %s92
    %p96 = scmp.eq.s32.totalorder %s14, 0
    %p97 = por %p95, %p96
    %p98 = scmp.ne.s32.totalorder %s90, %s92
    %p99 = scmp.eq.s32.totalorder %s19, 3
    %p100 = por %p98, %p99
    %p101 = scmp.ne.s32.totalorder %s92, %s93
    %p102 = scmp.eq.s32.totalorder %s19, 0
    %p103 = por %p101, %p102
    %p104 = scmp.ne.s32.totalorder %s92, %s93
    %p105 = scmp.eq.s32.totalorder %s20, 3
    %p106 = por %p104, %p105
    %p108 = scmp.ne.s32.totalorder %s93, %s107
    %p109 = scmp.eq.s32.totalorder %s20, 0
    %p110 = por %p108, %p109
    %s112 = sadd.s32 %s111, 1
    %p115 = scmp.eq.s32.totalorder %s14, 3
    %p116 = scmp.ne.s32.totalorder %s111, %s113
    %p117 = scmp.eq.s32.totalorder %s14, 0
    %p118 = por %p116, %p117
    %p119 = scmp.ne.s32.totalorder %s111, %s113
    %p120 = scmp.eq.s32.totalorder %s19, 3
    %p121 = por %p119, %p120
    %p122 = scmp.ne.s32.totalorder %s113, %s114
    %p123 = scmp.eq.s32.totalorder %s19, 0
    %p124 = por %p122, %p123
    %p125 = scmp.ne.s32.totalorder %s113, %s114
    %p126 = scmp.eq.s32.totalorder %s20, 3
    %p127 = por %p125, %p126
    %p129 = scmp.ne.s32.totalorder %s114, %s128
    %p130 = scmp.eq.s32.totalorder %s20, 0
    %p131 = por %p129, %p130
    %s132 = ssub.s32 %s14, %s21
    %p133 = scmp.eq.s32.totalorder %s132, 0
    %s135 = sadd.s32 %s134, 1
    %s136 = scalar_select %p133, %s134, %s135
    %p139 = pneg %p133
    %p140 = scmp.eq.s32.totalorder %s14, 3
    %p141 = por %p139, %p140
    %p142 = scmp.ne.s32.totalorder %s134, %s137
    %p143 = scmp.eq.s32.totalorder %s14, 0
    %p144 = por %p142, %p143
    %p145 = scmp.ne.s32.totalorder %s134, %s137
    %p146 = scmp.eq.s32.totalorder %s19, 3
    %p147 = por %p145, %p146
    %p148 = scmp.ne.s32.totalorder %s137, %s138
    %p149 = scmp.eq.s32.totalorder %s19, 0
    %p150 = por %p148, %p149
    %p151 = scmp.ne.s32.totalorder %s137, %s138
    %p152 = scmp.eq.s32.totalorder %s20, 3
    %p153 = por %p151, %p152
    %p155 = scmp.ne.s32.totalorder %s138, %s154
    %p156 = scmp.eq.s32.totalorder %s20, 0
    %p157 = por %p155, %p156
    %s159 = sadd.s32 %s158, 1
    %p162 = scmp.eq.s32.totalorder %s14, 3
    %p163 = scmp.ne.s32.totalorder %s158, %s160
    %p164 = scmp.eq.s32.totalorder %s14, 0
    %p165 = por %p163, %p164
    %p166 = scmp.ne.s32.totalorder %s158, %s160
    %p167 = scmp.eq.s32.totalorder %s19, 3
    %p168 = por %p166, %p167
    %p169 = scmp.ne.s32.totalorder %s160, %s161
    %p170 = scmp.eq.s32.totalorder %s19, 0
    %p171 = por %p169, %p170
    %p172 = scmp.ne.s32.totalorder %s160, %s161
    %p173 = scmp.eq.s32.totalorder %s20, 3
    %p174 = por %p172, %p173
    %p176 = scmp.ne.s32.totalorder %s161, %s175
    %p177 = scmp.eq.s32.totalorder %s20, 0
    %p178 = por %p176, %p177
    %s180 = sadd.s32 %s179, 1
    %p183 = scmp.eq.s32.totalorder %s14, 3
    %p184 = scmp.ne.s32.totalorder %s179, %s181
    %p185 = scmp.eq.s32.totalorder %s14, 0
    %p186 = por %p184, %p185
    %p187 = scmp.ne.s32.totalorder %s179, %s181
    %p188 = scmp.eq.s32.totalorder %s19, 3
    %p189 = por %p187, %p188
    %p190 = scmp.ne.s32.totalorder %s181, %s182
    %p191 = scmp.eq.s32.totalorder %s19, 0
    %p192 = por %p190, %p191
    %p193 = scmp.ne.s32.totalorder %s181, %s182
    %p194 = scmp.eq.s32.totalorder %s20, 3
    %p195 = por %p193, %p194
    %p197 = scmp.ne.s32.totalorder %s182, %s196
    %p198 = scmp.eq.s32.totalorder %s20, 0
    %p199 = por %p197, %p198
    %p200 = scmp.le.s32.totalorder 1, %s14
    %p201 = scmp.lt.s32.totalorder %s14, 5
    %p202 = pnand %p200, %p201
    %p203 = pneg %p202
    // Predicated region
    $region9: #{generator_forward.6} parent=5 // pred_check
      _
    $region10: #{generator_forward.6} parent=5 // pred_check_branch
      %205 = sbr.rel (%p202) target = $region12
    $region11: #{generator_forward.6} parent=5 // pred_region
      %s206 = ssub.s32 %s14, 1
      // Predicated region
      $region13: #{generator_forward.6} parent=11 // pred_check
        %p207 = pneg %p61
      $region14: #{generator_forward.6} parent=11 // pred_check_branch
        %209 = sbr.rel (%p207) target = $region16
      $region15: #{generator_forward.6} parent=11 // pred_region
        _
      $region16: #{generator_forward.6} parent=11 // pred_fallthru
        _
      // Predicated region
      $region17: #{generator_forward.6} parent=11 // pred_check
        %p210 = pneg %p82
      $region18: #{generator_forward.6} parent=11 // pred_check_branch
        %212 = sbr.rel (%p210) target = $region20
      $region19: #{generator_forward.6} parent=11 // pred_region
        _
      $region20: #{generator_forward.6} parent=11 // pred_fallthru
        _
      // Predicated region
      $region21: #{generator_forward.6} parent=11 // pred_check
        %p213 = pneg %p103
      $region22: #{generator_forward.6} parent=11 // pred_check_branch
        %215 = sbr.rel (%p213) target = $region24
      $region23: #{generator_forward.6} parent=11 // pred_region
        _
      $region24: #{generator_forward.6} parent=11 // pred_fallthru
        _
      // Predicated region
      $region25: #{generator_forward.6} parent=11 // pred_check
        %p216 = pneg %p124
      $region26: #{generator_forward.6} parent=11 // pred_check_branch
        %218 = sbr.rel (%p216) target = $region28
      $region27: #{generator_forward.6} parent=11 // pred_region
        _
      $region28: #{generator_forward.6} parent=11 // pred_fallthru
        _
    $region12: #{generator_forward.6} parent=5 // pred_fallthru
      _
    %p219 = scmp.lt.s32.totalorder %s14, 4
    // Predicated region
    $region29: #{generator_forward.6} parent=5 // pred_check
      %p220 = pneg %p219
    $region30: #{generator_forward.6} parent=5 // pred_check_branch
      %222 = sbr.rel (%p220) target = $region32
    $region31: #{generator_forward.6} parent=5 // pred_region
      // Predicated region
      $region33: #{generator_forward.6} parent=31 // pred_check
        %p223 = pneg %p34
      $region34: #{generator_forward.6} parent=31 // pred_check_branch
        %225 = sbr.rel (%p223) target = $region36
      $region35: #{generator_forward.6} parent=31 // pred_region
        %p226 = scmp.lt.s32.totalorder %s14, 3
        %s227 = scalar_select %p226, %s14, 3
        %s228 = smul.addr %s227, 8
        %s229 = scalar_lea.vmem %s0, %s228
      $region36: #{generator_forward.6} parent=31 // pred_fallthru
        _
    $region32: #{generator_forward.6} parent=5 // pred_fallthru
      _
    %p230 = scmp.le.s32.totalorder 1, %s14
    %p231 = scmp.lt.s32.totalorder %s14, 5
    %p232 = pnand %p230, %p231
    %p233 = pneg %p232
    // Predicated region
    $region37: #{generator_forward.6} parent=5 // pred_check
      _
    $region38: #{generator_forward.6} parent=5 // pred_check_branch
      %235 = sbr.rel (%p232) target = $region40
    $region39: #{generator_forward.6} parent=5 // pred_region
      %s236 = ssub.s32 %s14, 1
      %p237 = scmp.lt.s32.totalorder %s19, 3
      %s238 = scalar_select %p237, %s19, 3
      %s239 = smul.addr %s238, 8
      %s240 = scalar_lea.vmem %s0, %s239
      %p241 = pneg %p40
      %p242 = pneg %p37
      %p243 = pneg %p61
      %p244 = pneg %p58
      %p245 = pneg %p82
      %p246 = pneg %p79
      %p247 = pneg %p103
      %p248 = pneg %p100
      %p249 = pneg %p124
      %p250 = pneg %p121
      %p251 = pneg %p150
      %p252 = pneg %p147
      %p253 = scmp.lt.s32.totalorder %s19, 3
      %s254 = scalar_select %p253, %s19, 3
      %s255 = smul.addr %s254, 8
      %s256 = scalar_lea.vmem %s5, %s255
      %p257 = pneg %p171
      %p258 = pneg %p168
      %p259 = pneg %p192
      %p260 = pneg %p189
      %p261 = scmp.lt.s32.totalorder %s19, 3
      %s262 = scalar_select %p261, %s19, 3
      %s263 = smul.addr %s262, 8
      %s264 = scalar_lea.vmem %s0, %s263
      %p265 = scmp.lt.s32.totalorder %s19, 3
      %s266 = scalar_select %p265, %s19, 3
      %s267 = smul.addr %s266, 8
      %s268 = scalar_lea.vmem %s5, %s267
      %p270 = scmp.eq.s32.totalorder %s19, 0
      // Predicated region
      $region41: #{generator_forward.6} parent=39 // pred_check
        %p271 = pneg %p270
      $region42: #{generator_forward.6} parent=39 // pred_check_branch
        %273 = sbr.rel (%p271) target = $region44
      $region43: #{generator_forward.6} parent=39 // pred_region
        %274 = vst [vmem:[%s6] sm:$0x1] 0.0
        %275 = vst [vmem:[%s7] sm:$0x1] 0.0
      $region44: #{generator_forward.6} parent=39 // pred_fallthru
        _
      %v276 = vld [vmem:[%s264] sm:$0xff]
      %v277 = vld [vmem:[%s1] sm:$0x1]
      %v279 = vlaneseq
      %v280 = vshrl.u32 %v279, 7
      %v281 = vsub.s32 0, %v280
      %v282 = vrot.slane %v277, %v281
      %v284 = vmul.f32 %v276, %v282
      %v285 = vld [vmem:[%s2] sm:$0x1]
      %v287 = vlaneseq
      %v288 = vshrl.u32 %v287, 7
      %v289 = vsub.s32 0, %v288
      %v290 = vrot.slane %v285, %v289
      %v292 = vadd.f32 %v284, %v290
      %v293 = vpack.c.bf16 %v292, %v292
      %v294 = vld [vmem:[%s3] sm:$0xf]
      %v295 = vld [vmem:[%s3 + $0x4] sm:$0xf]
      %v296 = vld [vmem:[%s3 + $0x8] sm:$0xf]
      %v297 = vld [vmem:[%s3 + $0xc] sm:$0xf]
      %v298 = vld [vmem:[%s3 + $0x10] sm:$0xf]
      %v299 = vld [vmem:[%s3 + $0x14] sm:$0xf]
      %v300 = vld [vmem:[%s3 + $0x18] sm:$0xf]
      %v301 = vld [vmem:[%s3 + $0x1c] sm:$0xf]
      %v302 = vld [vmem:[%s4] sm:$0x1]
      %v304 = vlaneseq
      %v305 = vshrl.u32 %v304, 7
      %v306 = vsub.s32 0, %v305
      %v307 = vrot.slane %v302, %v306
      %v317 = vunpack.c.l.b16 %v294
      %v318 = vunpack.c.l.b16 %v295
      %v319 = vunpack.c.l.b16 %v296
      %v320 = vunpack.c.l.b16 %v297
      %v321 = vunpack.c.l.b16 %v298
      %v322 = vunpack.c.l.b16 %v299
      %v323 = vunpack.c.l.b16 %v300
      %v324 = vunpack.c.l.b16 %v301
      %v325 = vpack.c.b16 %v318, %v317
      %v326 = vpack.c.b16 %v320, %v319
      %v327 = vpack.c.b16 %v322, %v321
      %v328 = vpack.c.b16 %v324, %v323
      %vm333 = vcmask 523264
      %v335 = vsel %vm333, %v293, 0
      %337 = vmatprep.subr.bf16.mxu0 0
      %338 = vmatpush1.bf16.msra.mxu0 %v325
      %339 = vmatprep.subr.bf16.mxu0 0
      %340 = vmatpush1.bf16.msra.mxu0 %v326
      %341 = vmatprep.subr.bf16.mxu0 0
      %342 = vmatpush1.bf16.msra.mxu0 %v327
      %343 = vmatprep.subr.bf16.mxu0 0
      %344 = vmatpush1.bf16.msra.mxu0 %v328
      %345 = vmatprep.subr.bf16.mxu0 0
      %346 = vmatpush1.bf16.msra.mxu0 0
      %347 = vmatprep.subr.bf16.mxu0 0
      %348 = vmatpush1.bf16.msra.mxu0 0
      %349 = vmatprep.subr.bf16.mxu0 0
      %350 = vmatpush1.bf16.msra.mxu0 0
      %351 = vmatprep.subr.bf16.mxu0 0
      %352 = vmatpush1.bf16.msra.mxu0 0
      %353 = vmatprep.subr.bf16.mxu0 0
      %354 = vmatpush1.bf16.msra.mxu0 0
      %355 = vmatprep.subr.bf16.mxu0 0
      %356 = vmatpush1.bf16.msra.mxu0 0
      %357 = vmatprep.subr.bf16.mxu0 0
      %358 = vmatpush1.bf16.msra.mxu0 0
      %359 = vmatprep.subr.bf16.mxu0 0
      %360 = vmatpush1.bf16.msra.mxu0 0
      %361 = vmatprep.subr.bf16.mxu0 0
      %362 = vmatpush1.bf16.msra.mxu0 0
      %363 = vmatprep.subr.bf16.mxu0 0
      %364 = vmatpush1.bf16.msra.mxu0 0
      %365 = vmatprep.subr.bf16.mxu0 0
      %366 = vmatpush1.bf16.msra.mxu0 0
      %367 = vmatprep.subr.bf16.mxu0 0
      %368 = vmatpush1.bf16.msra.mxu0 0
      %369 = vmatprep.mubr.bf16.mxu0 0
      %370 = vmatmul.mubr.bf16.gmra.mrb[0].mxu0 %v335
      %v371 = vpop.f32.mrb[0].mxu0
      %v372 = vadd.f32 %v307, %v371
      %v373 = vpop.f32.mrb[0].mxu0
      %v374 = vpop.f32.mrb[0].mxu0
      %v375 = vpop.f32.mrb[0].mxu0
      %376 = vdwg.mxu0
      %vm377 = vcmp.gt.f32.partialorder %v372, 0.0
      %v378 = vmul.f32 %v372, 0.01
      %v379 = vsel %vm377, %v372, %v378
      %380 = vst [vmem:[%s268] sm:$0xff] %v379
      %v381 = vld [vmem:[%s6] sm:$0x1]
      %v382 = vrot.slane %v379, 4
      %v383 = vadd.f32 %v379, %v382
      %v384 = vrot.slane %v383, 2
      %v385 = vadd.f32 %v383, %v384
      %v386 = vrot.slane %v385, 1
      %v387 = vadd.f32 %v385, %v386
      %v388 = vadd.f32 %v381, %v387
      %389 = vst [vmem:[%s6] sm:$0x1] %v388
      %v390 = vld [vmem:[%s7] sm:$0x1]
      %v391 = vmul.f32 %v379, %v379
      %v392 = vrot.slane %v391, 4
      %v393 = vadd.f32 %v391, %v392
      %v394 = vrot.slane %v393, 2
      %v395 = vadd.f32 %v393, %v394
      %v396 = vrot.slane %v395, 1
      %v397 = vadd.f32 %v395, %v396
      %v398 = vadd.f32 %v390, %v397
      %399 = vst [vmem:[%s7] sm:$0x1] %v398
      %p400 = scmp.lt.s32.totalorder %s19, 3
      %s401 = scalar_select %p400, %s19, 3
      %s402 = smul.addr %s401, 8
      %s403 = scalar_lea.vmem %s5, %s402
      // Predicated region
      $region45: #{generator_forward.6} parent=39 // pred_check
        %p404 = pneg %p147
      $region46: #{generator_forward.6} parent=39 // pred_check_branch
        %406 = sbr.rel (%p404) target = $region48
      $region47: #{generator_forward.6} parent=39 // pred_region
        _
      $region48: #{generator_forward.6} parent=39 // pred_fallthru
        _
      // Predicated region
      $region49: #{generator_forward.6} parent=39 // pred_check
        %p407 = pneg %p168
      $region50: #{generator_forward.6} parent=39 // pred_check_branch
        %409 = sbr.rel (%p407) target = $region52
      $region51: #{generator_forward.6} parent=39 // pred_region
        _
      $region52: #{generator_forward.6} parent=39 // pred_fallthru
        _
      // Predicated region
      $region53: #{generator_forward.6} parent=39 // pred_check
        %p410 = pneg %p189
      $region54: #{generator_forward.6} parent=39 // pred_check_branch
        %412 = sbr.rel (%p410) target = $region56
      $region55: #{generator_forward.6} parent=39 // pred_region
        _
      $region56: #{generator_forward.6} parent=39 // pred_fallthru
        _
      // Predicated region
      $region57: #{generator_forward.6} parent=39 // pred_check
        %p413 = pneg %p168
      $region58: #{generator_forward.6} parent=39 // pred_check_branch
        %415 = sbr.rel (%p413) target = $region60
      $region59: #{generator_forward.6} parent=39 // pred_region
        _
      $region60: #{generator_forward.6} parent=39 // pred_fallthru
        _
      // Predicated region
      $region61: #{generator_forward.6} parent=39 // pred_check
        %p416 = pneg %p189
      $region62: #{generator_forward.6} parent=39 // pred_check_branch
        %418 = sbr.rel (%p416) target = $region64
      $region63: #{generator_forward.6} parent=39 // pred_region
        _
      $region64: #{generator_forward.6} parent=39 // pred_fallthru
        _
    $region40: #{generator_forward.6} parent=5 // pred_fallthru
      _
    %p419 = scmp.le.s32.totalorder 2, %s14
    // Predicated region
    $region65: #{generator_forward.6} parent=5 // pred_check
      %p420 = pneg %p419
    $region66: #{generator_forward.6} parent=5 // pred_check_branch
      %422 = sbr.rel (%p420) target = $region68
    $region67: #{generator_forward.6} parent=5 // pred_region
      %s423 = ssub.s32 %s14, 2
      // Predicated region
      $region69: #{generator_forward.6} parent=67 // pred_check
        %p424 = pneg %p153
      $region70: #{generator_forward.6} parent=67 // pred_check_branch
        %426 = sbr.rel (%p424) target = $region72
      $region71: #{generator_forward.6} parent=67 // pred_region
        %p427 = scmp.lt.s32.totalorder %s20, 3
        %s428 = scalar_select %p427, %s20, 3
        %s429 = smul.addr %s428, 8
        %s430 = scalar_lea.vmem %s5, %s429
      $region72: #{generator_forward.6} parent=67 // pred_fallthru
        _
    $region68: #{generator_forward.6} parent=5 // pred_fallthru
      _
  $region6: #{generator_forward.6} parent=0 // loop_footer
    %s18 = sadd.s32 1, %s14
  $region7: #{generator_forward.6} parent=0 // loop_footer_branch
    %13 = sbr.rel target = $region3
  $region8: #{generator_forward.6} parent=0 // loop_exit
    _

</llo_original>
